<compile_context>
chip_gen: v7x
topology: tpu7x:2x2x1
jax: 0.10.0
libtpu: 0.0.40
codegen_flags: <defaults>
</compile_context>

<pallas_src>
import jax
import jax.numpy as jnp
from jax import lax
from jax.experimental import pallas as pl
from jax.experimental.pallas import tpu as pltpu
import numpy as np


def _round_up(x, m):
    return (x + m - 1) // m * m


def image_lstm_kernel(x_ref, w_ih_ref, w_hh_ref, b_ref,
                      w1_ref, b1_ref, w2_ref, b2_ref, w3_ref,
                      out_ref,
                      gx_ref, hseq_ref, h_ref, c_ref, m_ref, l_ref, acc_ref):
    """One grid step = one chunk of Tc timesteps.

    x_ref    : (Tc*Bp, Dp)  bf16  time-major chunk of the input
    w_ih_ref : (Dp, 4*Hp)   bf16  input->gates weights, gate order (i, f, o, g)
    w_hh_ref : (Hp, 4*Hp)   bf16  hidden->gates weights, gate order (i, f, o, g)
    b_ref    : (1, 4*Hp)    f32   b_ih + b_hh (reordered / zero-padded)
    w1/b1    : (Hp, A1p) bf16, (1, A1p) f32    attention MLP layer 1
    w2/b2    : (A1p, A2p) bf16, (1, A2p) f32   attention MLP layer 2
    w3_ref   : (1, A2p)     f32   final projection as a row vector
    out_ref  : (Bp, Hp)     f32   attention-weighted sum (written on last step)
    gx_ref   : (Tc*Bp, 4*Hp) f32  scratch: chunk's x @ W_ih + b
    hseq_ref : (Tc*Bp, Hp)  bf16  scratch: chunk's hidden states
    h_ref/c_ref : (Bp, Hp)  f32   cross-chunk LSTM state carry
    m_ref/l_ref : (Bp, 1)   f32   online-softmax running max / denominator
    acc_ref  : (Bp, Hp)     f32   running attention-weighted sum
    """
    step = pl.program_id(0)
    Bp, Hp = h_ref.shape
    Tc = gx_ref.shape[0] // Bp
    f32, bf16 = jnp.float32, jnp.bfloat16

    @pl.when(step == 0)
    def _():
        h_ref[...] = jnp.zeros_like(h_ref)
        c_ref[...] = jnp.zeros_like(c_ref)
        m_ref[...] = jnp.full(m_ref.shape, -jnp.inf, f32)
        l_ref[...] = jnp.zeros_like(l_ref)
        acc_ref[...] = jnp.zeros_like(acc_ref)

    # ---- 1) input->gates for this chunk: one bf16 MXU matmul, f32 accum ----
    gx_ref[...] = jnp.dot(x_ref[...], w_ih_ref[...],
                          preferred_element_type=f32) + b_ref[...]

    # ---- 2) serial recurrence over the chunk ----
    # h/c are register-carried (no per-step VMEM round-trip on the serial
    # dependence chain); the loop is fully unrolled at trace time (Tc small).
    # For very large Tc switch to lax.fori_loop(..., unroll=2-4).
    w_hh = w_hh_ref[...]
    h = h_ref[...]
    c = c_ref[...]
    for t in range(Tc):
        gates = gx_ref[t * Bp:(t + 1) * Bp, :] + jnp.dot(
            h.astype(bf16), w_hh, preferred_element_type=f32)
        # gate order (i, f, o, g): sigmoid once on a contiguous 3*Hp slab
        sig = jax.nn.sigmoid(gates[:, 0:3 * Hp])
        g_g = jnp.tanh(gates[:, 3 * Hp:4 * Hp])
        c = sig[:, Hp:2 * Hp] * c + sig[:, 0:Hp] * g_g      # f*c + i*g
        h = sig[:, 2 * Hp:3 * Hp] * jnp.tanh(c)             # o*tanh(c)
        hseq_ref[t * Bp:(t + 1) * Bp, :] = h.astype(bf16)
    h_ref[...] = h
    c_ref[...] = c

    # ---- 3) attention MLP on this chunk's hidden states (bf16 MXU) ----
    hseq = hseq_ref[...]                                          # (Tc*Bp, Hp)
    a1 = jnp.maximum(
        jnp.dot(hseq, w1_ref[...], preferred_element_type=f32) + b1_ref[...],
        0.0)
    a2 = jnp.maximum(
        jnp.dot(a1.astype(bf16), w2_ref[...], preferred_element_type=f32)
        + b2_ref[...], 0.0)
    # final (A2 -> 1) projection: VPU multiply + lane reduce (no N=1 matmul);
    # the scalar bias b3 cancels in the softmax and is dropped.
    logits = jnp.sum(a2 * w3_ref[...], axis=-1, keepdims=True)    # (Tc*Bp, 1)

    # ---- 4) online softmax over time + running weighted sum ----
    logits3 = logits.reshape(Tc, Bp, 1)
    hseq3 = hseq.reshape(Tc, Bp, Hp).astype(f32)
    m_prev = m_ref[...]
    m_new = jnp.maximum(m_prev, jnp.max(logits3, axis=0))         # (Bp, 1)
    alpha = jnp.exp(m_prev - m_new)
    p = jnp.exp(logits3 - m_new)                                  # (Tc, Bp, 1)
    l_ref[...] = alpha * l_ref[...] + jnp.sum(p, axis=0)
    acc_ref[...] = alpha * acc_ref[...] + jnp.sum(p * hseq3, axis=0)
    m_ref[...] = m_new

    @pl.when(step == pl.num_programs(0) - 1)
    def _():
        out_ref[...] = acc_ref[...] * pl.reciprocal(l_ref[...], approx=True)


def _pad2(w, rows_p, cols_p):
    out = jnp.zeros((rows_p, cols_p), jnp.float32)
    return out.at[:w.shape[0], :w.shape[1]].set(w.astype(jnp.float32))


def _prep_lstm_weights(params, D, H, Dp, Hp):
    """Reorder gates (i,f,g,o) -> (i,f,o,g) and zero-pad to lane-dense shapes."""
    f32 = jnp.float32

    def reorder(w, rows, rows_p):
        blocks = [w[:, 0 * H:1 * H],   # i
                  w[:, 1 * H:2 * H],   # f
                  w[:, 3 * H:4 * H],   # o
                  w[:, 2 * H:3 * H]]   # g
        out = jnp.zeros((rows_p, 4 * Hp), f32)
        for k, blk in enumerate(blocks):
            out = out.at[:rows, k * Hp:k * Hp + H].set(blk.astype(f32))
        return out

    w_ih = reorder(params['w_ih'], D, Dp)
    w_hh = reorder(params['w_hh'], H, Hp)
    b = reorder(params['b'], 1, 1)
    return w_ih, w_hh, b


def image_lstm_forward(x, params, t_chunk=None):
    """x: (B, T, D) float32 -> (B, H) float32 (matches PyTorch ImageLSTM.forward)."""
    B, T, D = x.shape
    H = params['w_hh'].shape[0]
    A1, A2 = H // 2, H // 4

    # Pick the largest chunk length <= t_chunk that divides T (pad-free chunks).
    # TODO(synk): mask ragged timestep tails to allow arbitrary chunk sizes.
    if t_chunk is None:
        t_chunk = 16
    Tc = 1
    for c in range(min(T, max(1, t_chunk)), 0, -1):
        if T % c == 0:
            Tc = c
            break
    n_chunks = T // Tc

    Bp = _round_up(B, 16)       # sublane multiple (bf16 tile = 16 sublanes)
    Dp = _round_up(D, 128)      # lane multiple (contraction dim of precompute)
    Hp = _round_up(H, 128)      # lane multiple -> lane-dense gates/hseq/output
    A1p = _round_up(A1, 128)
    A2p = _round_up(A2, 128)

    f32, bf16 = jnp.float32, jnp.bfloat16

    # time-major, zero-pad batch/feature dims, flatten to (T*Bp, Dp), cast bf16
    x_tm = jnp.transpose(x, (1, 0, 2)).astype(f32)               # (T, B, D)
    x_pad = jnp.zeros((T, Bp, Dp), f32).at[:, :B, :D].set(x_tm)
    x_flat = x_pad.reshape(T * Bp, Dp).astype(bf16)

    w_ih, w_hh, b = _prep_lstm_weights(params, D, H, Dp, Hp)
    w_ih = w_ih.astype(bf16)
    w_hh = w_hh.astype(bf16)
    w1 = _pad2(params['w1'], Hp, A1p).astype(bf16)
    b1 = _pad2(params['b1'], 1, A1p)
    w2 = _pad2(params['w2'], A1p, A2p).astype(bf16)
    b2 = _pad2(params['b2'], 1, A2p)
    w3_row = _pad2(params['w3'].T, 1, A2p)                       # (1, A2p)
    # b3 is intentionally NOT passed: it cancels in the softmax.

    out_pad = pl.pallas_call(
        image_lstm_kernel,
        out_shape=jax.ShapeDtypeStruct((Bp, Hp), f32),
        grid_spec=pltpu.PrefetchScalarGridSpec(
            num_scalar_prefetch=0,
            grid=(n_chunks,),
            in_specs=[
                pl.BlockSpec((Tc * Bp, Dp), lambda i: (i, 0)),    # x chunk
                pl.BlockSpec((Dp, 4 * Hp), lambda i: (0, 0)),     # W_ih
                pl.BlockSpec((Hp, 4 * Hp), lambda i: (0, 0)),     # W_hh
                pl.BlockSpec((1, 4 * Hp), lambda i: (0, 0)),      # b
                pl.BlockSpec((Hp, A1p), lambda i: (0, 0)),        # W1
                pl.BlockSpec((1, A1p), lambda i: (0, 0)),         # b1
                pl.BlockSpec((A1p, A2p), lambda i: (0, 0)),       # W2
                pl.BlockSpec((1, A2p), lambda i: (0, 0)),         # b2
                pl.BlockSpec((1, A2p), lambda i: (0, 0)),         # w3 row
            ],
            out_specs=pl.BlockSpec((Bp, Hp), lambda i: (0, 0)),
            scratch_shapes=[
                pltpu.VMEM((Tc * Bp, 4 * Hp), f32),   # chunk input-gate precompute
                pltpu.VMEM((Tc * Bp, Hp), bf16),      # chunk hidden states
                pltpu.VMEM((Bp, Hp), f32),            # carried h
                pltpu.VMEM((Bp, Hp), f32),            # carried c
                pltpu.VMEM((Bp, 1), f32),             # online-softmax running max
                pltpu.VMEM((Bp, 1), f32),             # online-softmax denominator
                pltpu.VMEM((Bp, Hp), f32),            # weighted-sum accumulator
            ],
        ),
        compiler_params=pltpu.CompilerParams(
            dimension_semantics=("arbitrary",),       # serial over time chunks
            vmem_limit_bytes=48 * 1024 * 1024,        # headroom under v7x 64 MiB
        ),
    )(x_flat, w_ih, w_hh, b, w1, b1, w2, b2, w3_row)

    return out_pad[:B, :H]


def init_params(key, input_size, hidden_size):
    """Deterministic synthetic parameters matching nn.LSTM / AttentionNet shapes."""
    D, H = input_size, hidden_size
    ks = jax.random.split(key, 10)
    s = 1.0 / np.sqrt(H)
    u = lambda k, shape: jax.random.uniform(k, shape, jnp.float32, -s, s)
    # LSTM: PyTorch weight_ih_l0 is (4H, D); we store the transpose (D, 4H),
    # PyTorch gate order (i, f, g, o).
    w_ih = u(ks[0], (D, 4 * H))
    w_hh = u(ks[1], (H, 4 * H))
    b = u(ks[2], (1, 4 * H)) + u(ks[3], (1, 4 * H))   # b_ih + b_hh
    # AttentionNet: Linear(H, H/2), Linear(H/2, H/4), Linear(H/4, 1)
    w1 = u(ks[4], (H, H // 2));       b1 = u(ks[5], (1, H // 2))
    w2 = u(ks[6], (H // 2, H // 4));  b2 = u(ks[7], (1, H // 4))
    w3 = u(ks[8], (H // 4, 1));       b3 = u(ks[9], (1, 1))
    return dict(w_ih=w_ih, w_hh=w_hh, b=b,
                w1=w1, b1=b1, w2=w2, b2=b2, w3=w3, b3=b3)


def reference_forward(x, params):
    """Pure-JAX f32 reference with identical semantics (for correctness check)."""
    B, T, D = x.shape
    H = params['w_hh'].shape[0]

    def step(carry, x_t):
        h, c = carry
        gates = x_t @ params['w_ih'] + h @ params['w_hh'] + params['b']
        i = jax.nn.sigmoid(gates[:, 0 * H:1 * H])
        f = jax.nn.sigmoid(gates[:, 1 * H:2 * H])
        g = jnp.tanh(gates[:, 2 * H:3 * H])
        o = jax.nn.sigmoid(gates[:, 3 * H:4 * H])
        c = f * c + i * g
        h = o * jnp.tanh(c)
        return (h, c), h

    h0 = jnp.zeros((B, H), jnp.float32)
    c0 = jnp.zeros((B, H), jnp.float32)
    (_, _), hs = lax.scan(step, (h0, c0), jnp.transpose(x, (1, 0, 2)))
    out = jnp.transpose(hs, (1, 0, 2))                # (B, T, H)
    a1 = jax.nn.relu(out @ params['w1'] + params['b1'])
    a2 = jax.nn.relu(a1 @ params['w2'] + params['b2'])
    logits = a2 @ params['w3'] + params['b3']         # (B, T, 1)
    attn = jax.nn.softmax(logits, axis=1)
    return jnp.sum(attn * out, axis=1)                # (B, H)


if __name__ == "__main__":
    B, T, D, H = 2, 8, 16, 32          # batch, seq len, input_size, hidden_size
    key = jax.random.PRNGKey(0)
    kx, kp = jax.random.split(key)
    x = jax.random.normal(kx, (B, T, D), jnp.float32)
    params = init_params(kp, D, H)

    # t_chunk=4 -> grid=(2,): exercises cross-chunk h/c carry + online softmax.
    out = image_lstm_forward(x, params, t_chunk=4)
    out = jax.block_until_ready(out)

    ref = jax.block_until_ready(reference_forward(x, params))
    # bf16 MXU operands (f32 accumulation) vs the pure-f32 reference.
    np.testing.assert_allclose(np.asarray(out), np.asarray(ref),
                               rtol=2e-2, atol=2e-2)
    assert out.shape == (B, H) and out.dtype == jnp.float32
    print("KERNEL_OK")
</pallas_src>

<mosaic_0001>
module attributes {stable_mosaic.version = 11 : i64} {
  func.func @image_lstm_kernel(%arg0: i32, %arg1: memref<64x128xbf16, #tpu.memory_space<vmem>>, %arg2: memref<128x512xbf16, #tpu.memory_space<vmem>>, %arg3: memref<128x512xbf16, #tpu.memory_space<vmem>>, %arg4: memref<1x512xf32, #tpu.memory_space<vmem>>, %arg5: memref<128x128xbf16, #tpu.memory_space<vmem>>, %arg6: memref<1x128xf32, #tpu.memory_space<vmem>>, %arg7: memref<128x128xbf16, #tpu.memory_space<vmem>>, %arg8: memref<1x128xf32, #tpu.memory_space<vmem>>, %arg9: memref<1x128xf32, #tpu.memory_space<vmem>>, %arg10: memref<16x128xf32, #tpu.memory_space<vmem>>, %arg11: memref<64x512xf32, #tpu.memory_space<vmem>>, %arg12: memref<64x128xbf16, #tpu.memory_space<vmem>>, %arg13: memref<16x128xf32, #tpu.memory_space<vmem>>, %arg14: memref<16x128xf32, #tpu.memory_space<vmem>>, %arg15: memref<16x1xf32, #tpu.memory_space<vmem>>, %arg16: memref<16x1xf32, #tpu.memory_space<vmem>>, %arg17: memref<16x128xf32, #tpu.memory_space<vmem>>) attributes {dimension_semantics = [#tpu.dimension_semantics<arbitrary>], iteration_bounds = array<i64: 2>, scalar_prefetch = 0 : i64, scratch_operands = 7 : i64, tpu.core_type = #tpu.core_type<tc>, window_params = [{transform_indices = @transform_0, window_bounds = array<i64: 64, 128>}, {pipeline_mode = #tpu.pipeline_mode<synchronous>, transform_indices = @transform_1, window_bounds = array<i64: 128, 512>}, {pipeline_mode = #tpu.pipeline_mode<synchronous>, transform_indices = @transform_2, window_bounds = array<i64: 128, 512>}, {pipeline_mode = #tpu.pipeline_mode<synchronous>, transform_indices = @transform_3, window_bounds = array<i64: 1, 512>}, {pipeline_mode = #tpu.pipeline_mode<synchronous>, transform_indices = @transform_4, window_bounds = array<i64: 128, 128>}, {pipeline_mode = #tpu.pipeline_mode<synchronous>, transform_indices = @transform_5, window_bounds = array<i64: 1, 128>}, {pipeline_mode = #tpu.pipeline_mode<synchronous>, transform_indices = @transform_6, window_bounds = array<i64: 128, 128>}, {pipeline_mode = #tpu.pipeline_mode<synchronous>, transform_indices = @transform_7, window_bounds = array<i64: 1, 128>}, {pipeline_mode = #tpu.pipeline_mode<synchronous>, transform_indices = @transform_8, window_bounds = array<i64: 1, 128>}, {pipeline_mode = #tpu.pipeline_mode<synchronous>, transform_indices = @transform_9, window_bounds = array<i64: 16, 128>}]} {
    %c0_i32 = arith.constant 0 : i32
    %0 = arith.cmpi eq, %arg0, %c0_i32 : i32
    %1 = arith.extui %0 : i1 to i32
    %c0_i32_0 = arith.constant 0 : i32
    %2 = arith.cmpi ne, %1, %c0_i32_0 : i32
    scf.if %2 {
      %cst_72 = arith.constant 0.000000e+00 : f32
      %153 = vector.broadcast %cst_72 : f32 to vector<16x128xf32>
      %c0_73 = arith.constant 0 : index
      %c0_74 = arith.constant 0 : index
      %154 = vector.load %arg13[%c0_73, %c0_74] : memref<16x128xf32, #tpu.memory_space<vmem>>, vector<16x128xf32>
      tpu.vector_store %arg13[%c0_73, %c0_74], %153 {strides = array<i32>} : memref<16x128xf32, #tpu.memory_space<vmem>>, vector<16x128xf32>,
      %cst_75 = arith.constant 0.000000e+00 : f32
      %155 = vector.broadcast %cst_75 : f32 to vector<16x128xf32>
      %c0_76 = arith.constant 0 : index
      %c0_77 = arith.constant 0 : index
      %156 = vector.load %arg14[%c0_76, %c0_77] : memref<16x128xf32, #tpu.memory_space<vmem>>, vector<16x128xf32>
      tpu.vector_store %arg14[%c0_76, %c0_77], %155 {strides = array<i32>} : memref<16x128xf32, #tpu.memory_space<vmem>>, vector<16x128xf32>,
      %cst_78 = arith.constant 0xFF800000 : f32
      %157 = vector.broadcast %cst_78 : f32 to vector<16x1xf32>
      %c0_79 = arith.constant 0 : index
      %c0_80 = arith.constant 0 : index
      %158 = vector.load %arg15[%c0_79, %c0_80] : memref<16x1xf32, #tpu.memory_space<vmem>>, vector<16x1xf32>
      tpu.vector_store %arg15[%c0_79, %c0_80], %157 {strides = array<i32>} : memref<16x1xf32, #tpu.memory_space<vmem>>, vector<16x1xf32>,
      %cst_81 = arith.constant 0.000000e+00 : f32
      %159 = vector.broadcast %cst_81 : f32 to vector<16x1xf32>
      %c0_82 = arith.constant 0 : index
      %c0_83 = arith.constant 0 : index
      %160 = vector.load %arg16[%c0_82, %c0_83] : memref<16x1xf32, #tpu.memory_space<vmem>>, vector<16x1xf32>
      tpu.vector_store %arg16[%c0_82, %c0_83], %159 {strides = array<i32>} : memref<16x1xf32, #tpu.memory_space<vmem>>, vector<16x1xf32>,
      %cst_84 = arith.constant 0.000000e+00 : f32
      %161 = vector.broadcast %cst_84 : f32 to vector<16x128xf32>
      %c0_85 = arith.constant 0 : index
      %c0_86 = arith.constant 0 : index
      %162 = vector.load %arg17[%c0_85, %c0_86] : memref<16x128xf32, #tpu.memory_space<vmem>>, vector<16x128xf32>
      tpu.vector_store %arg17[%c0_85, %c0_86], %161 {strides = array<i32>} : memref<16x128xf32, #tpu.memory_space<vmem>>, vector<16x128xf32>,
    } else {
    }
    %c0 = arith.constant 0 : index
    %c0_1 = arith.constant 0 : index
    %3 = vector.load %arg1[%c0, %c0_1] : memref<64x128xbf16, #tpu.memory_space<vmem>>, vector<64x128xbf16>
    %c0_2 = arith.constant 0 : index
    %c0_3 = arith.constant 0 : index
    %4 = vector.load %arg2[%c0_2, %c0_3] : memref<128x512xbf16, #tpu.memory_space<vmem>>, vector<128x512xbf16>
    %cst = arith.constant dense<0.000000e+00> : vector<64x512xf32>
    %5 = tpu.matmul %3, %4, %cst {dimension_numbers = #tpu.dot_dimension_numbers<[1], [0], [0], [1], [0, 0, 1, 1], [], []>} : vector<64x128xbf16>, vector<128x512xbf16>, vector<64x512xf32> -> vector<64x512xf32>
    %c0_4 = arith.constant 0 : index
    %c0_5 = arith.constant 0 : index
    %6 = vector.load %arg4[%c0_4, %c0_5] : memref<1x512xf32, #tpu.memory_space<vmem>>, vector<1x512xf32>
    %7 = vector.broadcast %6 : vector<1x512xf32> to vector<64x512xf32>
    %8 = arith.addf %5, %7 : vector<64x512xf32>
    %c0_6 = arith.constant 0 : index
    %c0_7 = arith.constant 0 : index
    %9 = vector.load %arg11[%c0_6, %c0_7] : memref<64x512xf32, #tpu.memory_space<vmem>>, vector<64x512xf32>
    tpu.vector_store %arg11[%c0_6, %c0_7], %8 {strides = array<i32>} : memref<64x512xf32, #tpu.memory_space<vmem>>, vector<64x512xf32>,
    %c0_8 = arith.constant 0 : index
    %c0_9 = arith.constant 0 : index
    %10 = vector.load %arg3[%c0_8, %c0_9] : memref<128x512xbf16, #tpu.memory_space<vmem>>, vector<128x512xbf16>
    %c0_10 = arith.constant 0 : index
    %c0_11 = arith.constant 0 : index
    %11 = vector.load %arg13[%c0_10, %c0_11] : memref<16x128xf32, #tpu.memory_space<vmem>>, vector<16x128xf32>
    %c0_12 = arith.constant 0 : index
    %c0_13 = arith.constant 0 : index
    %12 = vector.load %arg14[%c0_12, %c0_13] : memref<16x128xf32, #tpu.memory_space<vmem>>, vector<16x128xf32>
    %c0_14 = arith.constant 0 : index
    %c0_15 = arith.constant 0 : index
    %13 = vector.load %arg11[%c0_14, %c0_15] : memref<64x512xf32, #tpu.memory_space<vmem>>, vector<16x512xf32>
    %14 = arith.truncf %11 : vector<16x128xf32> to vector<16x128xbf16>
    %cst_16 = arith.constant dense<0.000000e+00> : vector<16x512xf32>
    %15 = tpu.matmul %14, %10, %cst_16 {dimension_numbers = #tpu.dot_dimension_numbers<[1], [0], [0], [1], [0, 0, 1, 1], [], []>} : vector<16x128xbf16>, vector<128x512xbf16>, vector<16x512xf32> -> vector<16x512xf32>
    %16 = arith.addf %13, %15 : vector<16x512xf32>
    %17 = vector.extract_strided_slice %16 {offsets = [0, 0], sizes = [16, 384], strides = [1, 1]} : vector<16x512xf32> to vector<16x384xf32>
    %18 = arith.negf %17 : vector<16x384xf32>
    %19 = math.exp %18 : vector<16x384xf32>
    %cst_17 = arith.constant 1.000000e+00 : f32
    %20 = vector.broadcast %cst_17 : f32 to vector<16x384xf32>
    %21 = arith.addf %20, %19 : vector<16x384xf32>
    %22 = arith.divf %20, %21 : vector<16x384xf32>
    %23 = vector.extract_strided_slice %16 {offsets = [0, 384], sizes = [16, 128], strides = [1, 1]} : vector<16x512xf32> to vector<16x128xf32>
    %24 = math.tanh %23 : vector<16x128xf32>
    %25 = vector.extract_strided_slice %22 {offsets = [0, 128], sizes = [16, 128], strides = [1, 1]} : vector<16x384xf32> to vector<16x128xf32>
    %26 = arith.mulf %25, %12 : vector<16x128xf32>
    %27 = vector.extract_strided_slice %22 {offsets = [0, 0], sizes = [16, 128], strides = [1, 1]} : vector<16x384xf32> to vector<16x128xf32>
    %28 = arith.mulf %27, %24 : vector<16x128xf32>
    %29 = arith.addf %26, %28 : vector<16x128xf32>
    %30 = vector.extract_strided_slice %22 {offsets = [0, 256], sizes = [16, 128], strides = [1, 1]} : vector<16x384xf32> to vector<16x128xf32>
    %31 = math.tanh %29 : vector<16x128xf32>
    %32 = arith.mulf %30, %31 : vector<16x128xf32>
    %33 = arith.truncf %32 : vector<16x128xf32> to vector<16x128xbf16>
    %c0_18 = arith.constant 0 : index
    %c0_19 = arith.constant 0 : index
    %34 = vector.load %arg12[%c0_18, %c0_19] : memref<64x128xbf16, #tpu.memory_space<vmem>>, vector<16x128xbf16>
    tpu.vector_store %arg12[%c0_18, %c0_19], %33 {strides = array<i32>} : memref<64x128xbf16, #tpu.memory_space<vmem>>, vector<16x128xbf16>,
    %c16 = arith.constant 16 : index
    %c0_20 = arith.constant 0 : index
    %35 = vector.load %arg11[%c16, %c0_20] : memref<64x512xf32, #tpu.memory_space<vmem>>, vector<16x512xf32>
    %36 = arith.truncf %32 : vector<16x128xf32> to vector<16x128xbf16>
    %cst_21 = arith.constant dense<0.000000e+00> : vector<16x512xf32>
    %37 = tpu.matmul %36, %10, %cst_21 {dimension_numbers = #tpu.dot_dimension_numbers<[1], [0], [0], [1], [0, 0, 1, 1], [], []>} : vector<16x128xbf16>, vector<128x512xbf16>, vector<16x512xf32> -> vector<16x512xf32>
    %38 = arith.addf %35, %37 : vector<16x512xf32>
    %39 = vector.extract_strided_slice %38 {offsets = [0, 0], sizes = [16, 384], strides = [1, 1]} : vector<16x512xf32> to vector<16x384xf32>
    %40 = arith.negf %39 : vector<16x384xf32>
    %41 = math.exp %40 : vector<16x384xf32>
    %cst_22 = arith.constant 1.000000e+00 : f32
    %42 = vector.broadcast %cst_22 : f32 to vector<16x384xf32>
    %43 = arith.addf %42, %41 : vector<16x384xf32>
    %44 = arith.divf %42, %43 : vector<16x384xf32>
    %45 = vector.extract_strided_slice %38 {offsets = [0, 384], sizes = [16, 128], strides = [1, 1]} : vector<16x512xf32> to vector<16x128xf32>
    %46 = math.tanh %45 : vector<16x128xf32>
    %47 = vector.extract_strided_slice %44 {offsets = [0, 128], sizes = [16, 128], strides = [1, 1]} : vector<16x384xf32> to vector<16x128xf32>
    %48 = arith.mulf %47, %29 : vector<16x128xf32>
    %49 = vector.extract_strided_slice %44 {offsets = [0, 0], sizes = [16, 128], strides = [1, 1]} : vector<16x384xf32> to vector<16x128xf32>
    %50 = arith.mulf %49, %46 : vector<16x128xf32>
    %51 = arith.addf %48, %50 : vector<16x128xf32>
    %52 = vector.extract_strided_slice %44 {offsets = [0, 256], sizes = [16, 128], strides = [1, 1]} : vector<16x384xf32> to vector<16x128xf32>
    %53 = math.tanh %51 : vector<16x128xf32>
    %54 = arith.mulf %52, %53 : vector<16x128xf32>
    %55 = arith.truncf %54 : vector<16x128xf32> to vector<16x128xbf16>
    %c16_23 = arith.constant 16 : index
    %c0_24 = arith.constant 0 : index
    %56 = vector.load %arg12[%c16_23, %c0_24] : memref<64x128xbf16, #tpu.memory_space<vmem>>, vector<16x128xbf16>
    tpu.vector_store %arg12[%c16_23, %c0_24], %55 {strides = array<i32>} : memref<64x128xbf16, #tpu.memory_space<vmem>>, vector<16x128xbf16>,
    %c32 = arith.constant 32 : index
    %c0_25 = arith.constant 0 : index
    %57 = vector.load %arg11[%c32, %c0_25] : memref<64x512xf32, #tpu.memory_space<vmem>>, vector<16x512xf32>
    %58 = arith.truncf %54 : vector<16x128xf32> to vector<16x128xbf16>
    %cst_26 = arith.constant dense<0.000000e+00> : vector<16x512xf32>
    %59 = tpu.matmul %58, %10, %cst_26 {dimension_numbers = #tpu.dot_dimension_numbers<[1], [0], [0], [1], [0, 0, 1, 1], [], []>} : vector<16x128xbf16>, vector<128x512xbf16>, vector<16x512xf32> -> vector<16x512xf32>
    %60 = arith.addf %57, %59 : vector<16x512xf32>
    %61 = vector.extract_strided_slice %60 {offsets = [0, 0], sizes = [16, 384], strides = [1, 1]} : vector<16x512xf32> to vector<16x384xf32>
    %62 = arith.negf %61 : vector<16x384xf32>
    %63 = math.exp %62 : vector<16x384xf32>
    %cst_27 = arith.constant 1.000000e+00 : f32
    %64 = vector.broadcast %cst_27 : f32 to vector<16x384xf32>
    %65 = arith.addf %64, %63 : vector<16x384xf32>
    %66 = arith.divf %64, %65 : vector<16x384xf32>
    %67 = vector.extract_strided_slice %60 {offsets = [0, 384], sizes = [16, 128], strides = [1, 1]} : vector<16x512xf32> to vector<16x128xf32>
    %68 = math.tanh %67 : vector<16x128xf32>
    %69 = vector.extract_strided_slice %66 {offsets = [0, 128], sizes = [16, 128], strides = [1, 1]} : vector<16x384xf32> to vector<16x128xf32>
    %70 = arith.mulf %69, %51 : vector<16x128xf32>
    %71 = vector.extract_strided_slice %66 {offsets = [0, 0], sizes = [16, 128], strides = [1, 1]} : vector<16x384xf32> to vector<16x128xf32>
    %72 = arith.mulf %71, %68 : vector<16x128xf32>
    %73 = arith.addf %70, %72 : vector<16x128xf32>
    %74 = vector.extract_strided_slice %66 {offsets = [0, 256], sizes = [16, 128], strides = [1, 1]} : vector<16x384xf32> to vector<16x128xf32>
    %75 = math.tanh %73 : vector<16x128xf32>
    %76 = arith.mulf %74, %75 : vector<16x128xf32>
    %77 = arith.truncf %76 : vector<16x128xf32> to vector<16x128xbf16>
    %c32_28 = arith.constant 32 : index
    %c0_29 = arith.constant 0 : index
    %78 = vector.load %arg12[%c32_28, %c0_29] : memref<64x128xbf16, #tpu.memory_space<vmem>>, vector<16x128xbf16>
    tpu.vector_store %arg12[%c32_28, %c0_29], %77 {strides = array<i32>} : memref<64x128xbf16, #tpu.memory_space<vmem>>, vector<16x128xbf16>,
    %c48 = arith.constant 48 : index
    %c0_30 = arith.constant 0 : index
    %79 = vector.load %arg11[%c48, %c0_30] : memref<64x512xf32, #tpu.memory_space<vmem>>, vector<16x512xf32>
    %80 = arith.truncf %76 : vector<16x128xf32> to vector<16x128xbf16>
    %cst_31 = arith.constant dense<0.000000e+00> : vector<16x512xf32>
    %81 = tpu.matmul %80, %10, %cst_31 {dimension_numbers = #tpu.dot_dimension_numbers<[1], [0], [0], [1], [0, 0, 1, 1], [], []>} : vector<16x128xbf16>, vector<128x512xbf16>, vector<16x512xf32> -> vector<16x512xf32>
    %82 = arith.addf %79, %81 : vector<16x512xf32>
    %83 = vector.extract_strided_slice %82 {offsets = [0, 0], sizes = [16, 384], strides = [1, 1]} : vector<16x512xf32> to vector<16x384xf32>
    %84 = arith.negf %83 : vector<16x384xf32>
    %85 = math.exp %84 : vector<16x384xf32>
    %cst_32 = arith.constant 1.000000e+00 : f32
    %86 = vector.broadcast %cst_32 : f32 to vector<16x384xf32>
    %87 = arith.addf %86, %85 : vector<16x384xf32>
    %88 = arith.divf %86, %87 : vector<16x384xf32>
    %89 = vector.extract_strided_slice %82 {offsets = [0, 384], sizes = [16, 128], strides = [1, 1]} : vector<16x512xf32> to vector<16x128xf32>
    %90 = math.tanh %89 : vector<16x128xf32>
    %91 = vector.extract_strided_slice %88 {offsets = [0, 128], sizes = [16, 128], strides = [1, 1]} : vector<16x384xf32> to vector<16x128xf32>
    %92 = arith.mulf %91, %73 : vector<16x128xf32>
    %93 = vector.extract_strided_slice %88 {offsets = [0, 0], sizes = [16, 128], strides = [1, 1]} : vector<16x384xf32> to vector<16x128xf32>
    %94 = arith.mulf %93, %90 : vector<16x128xf32>
    %95 = arith.addf %92, %94 : vector<16x128xf32>
    %96 = vector.extract_strided_slice %88 {offsets = [0, 256], sizes = [16, 128], strides = [1, 1]} : vector<16x384xf32> to vector<16x128xf32>
    %97 = math.tanh %95 : vector<16x128xf32>
    %98 = arith.mulf %96, %97 : vector<16x128xf32>
    %99 = arith.truncf %98 : vector<16x128xf32> to vector<16x128xbf16>
    %c48_33 = arith.constant 48 : index
    %c0_34 = arith.constant 0 : index
    %100 = vector.load %arg12[%c48_33, %c0_34] : memref<64x128xbf16, #tpu.memory_space<vmem>>, vector<16x128xbf16>
    tpu.vector_store %arg12[%c48_33, %c0_34], %99 {strides = array<i32>} : memref<64x128xbf16, #tpu.memory_space<vmem>>, vector<16x128xbf16>,
    %c0_35 = arith.constant 0 : index
    %c0_36 = arith.constant 0 : index
    %101 = vector.load %arg13[%c0_35, %c0_36] : memref<16x128xf32, #tpu.memory_space<vmem>>, vector<16x128xf32>
    tpu.vector_store %arg13[%c0_35, %c0_36], %98 {strides = array<i32>} : memref<16x128xf32, #tpu.memory_space<vmem>>, vector<16x128xf32>,
    %c0_37 = arith.constant 0 : index
    %c0_38 = arith.constant 0 : index
    %102 = vector.load %arg14[%c0_37, %c0_38] : memref<16x128xf32, #tpu.memory_space<vmem>>, vector<16x128xf32>
    tpu.vector_store %arg14[%c0_37, %c0_38], %95 {strides = array<i32>} : memref<16x128xf32, #tpu.memory_space<vmem>>, vector<16x128xf32>,
    %c0_39 = arith.constant 0 : index
    %c0_40 = arith.constant 0 : index
    %103 = vector.load %arg12[%c0_39, %c0_40] : memref<64x128xbf16, #tpu.memory_space<vmem>>, vector<64x128xbf16>
    %c0_41 = arith.constant 0 : index
    %c0_42 = arith.constant 0 : index
    %104 = vector.load %arg5[%c0_41, %c0_42] : memref<128x128xbf16, #tpu.memory_space<vmem>>, vector<128x128xbf16>
    %cst_43 = arith.constant dense<0.000000e+00> : vector<64x128xf32>
    %105 = tpu.matmul %103, %104, %cst_43 {dimension_numbers = #tpu.dot_dimension_numbers<[1], [0], [0], [1], [0, 0, 1, 1], [], []>} : vector<64x128xbf16>, vector<128x128xbf16>, vector<64x128xf32> -> vector<64x128xf32>
    %c0_44 = arith.constant 0 : index
    %c0_45 = arith.constant 0 : index
    %106 = vector.load %arg6[%c0_44, %c0_45] : memref<1x128xf32, #tpu.memory_space<vmem>>, vector<1x128xf32>
    %107 = vector.broadcast %106 : vector<1x128xf32> to vector<64x128xf32>
    %108 = arith.addf %105, %107 : vector<64x128xf32>
    %cst_46 = arith.constant 0.000000e+00 : f32
    %109 = vector.broadcast %cst_46 : f32 to vector<64x128xf32>
    %110 = arith.maximumf %108, %109 : vector<64x128xf32>
    %111 = arith.truncf %110 : vector<64x128xf32> to vector<64x128xbf16>
    %c0_47 = arith.constant 0 : index
    %c0_48 = arith.constant 0 : index
    %112 = vector.load %arg7[%c0_47, %c0_48] : memref<128x128xbf16, #tpu.memory_space<vmem>>, vector<128x128xbf16>
    %cst_49 = arith.constant dense<0.000000e+00> : vector<64x128xf32>
    %113 = tpu.matmul %111, %112, %cst_49 {dimension_numbers = #tpu.dot_dimension_numbers<[1], [0], [0], [1], [0, 0, 1, 1], [], []>} : vector<64x128xbf16>, vector<128x128xbf16>, vector<64x128xf32> -> vector<64x128xf32>
    %c0_50 = arith.constant 0 : index
    %c0_51 = arith.constant 0 : index
    %114 = vector.load %arg8[%c0_50, %c0_51] : memref<1x128xf32, #tpu.memory_space<vmem>>, vector<1x128xf32>
    %115 = vector.broadcast %114 : vector<1x128xf32> to vector<64x128xf32>
    %116 = arith.addf %113, %115 : vector<64x128xf32>
    %cst_52 = arith.constant 0.000000e+00 : f32
    %117 = vector.broadcast %cst_52 : f32 to vector<64x128xf32>
    %118 = arith.maximumf %116, %117 : vector<64x128xf32>
    %c0_53 = arith.constant 0 : index
    %c0_54 = arith.constant 0 : index
    %119 = vector.load %arg9[%c0_53, %c0_54] : memref<1x128xf32, #tpu.memory_space<vmem>>, vector<1x128xf32>
    %120 = vector.broadcast %119 : vector<1x128xf32> to vector<64x128xf32>
    %121 = arith.mulf %118, %120 : vector<64x128xf32>
    %cst_55 = arith.constant dense<0.000000e+00> : vector<64xf32>
    %122 = vector.multi_reduction <add>, %121, %cst_55 [1] : vector<64x128xf32> to vector<64xf32>
    %123 = vector.shape_cast %122 : vector<64xf32> to vector<64x1xf32>
    %124 = vector.shape_cast %123 : vector<64x1xf32> to vector<4x16x1xf32>
    %125 = vector.shape_cast %103 : vector<64x128xbf16> to vector<4x16x128xbf16>
    %126 = arith.extf %125 : vector<4x16x128xbf16> to vector<4x16x128xf32>
    %c0_56 = arith.constant 0 : index
    %c0_57 = arith.constant 0 : index
    %127 = vector.load %arg15[%c0_56, %c0_57] : memref<16x1xf32, #tpu.memory_space<vmem>>, vector<16x1xf32>
    %cst_58 = arith.constant dense<0xFF800000> : vector<16x1xf32>
    %128 = vector.multi_reduction <maximumf>, %124, %cst_58 [0] : vector<4x16x1xf32> to vector<16x1xf32>
    %129 = arith.maximumf %127, %128 : vector<16x1xf32>
    %130 = arith.subf %127, %129 : vector<16x1xf32>
    %131 = math.exp %130 : vector<16x1xf32>
    %132 = vector.shape_cast %129 : vector<16x1xf32> to vector<1x16x1xf32>
    %133 = vector.broadcast %132 : vector<1x16x1xf32> to vector<4x16x1xf32>
    %134 = arith.subf %124, %133 : vector<4x16x1xf32>
    %135 = math.exp %134 : vector<4x16x1xf32>
    %c0_59 = arith.constant 0 : index
    %c0_60 = arith.constant 0 : index
    %136 = vector.load %arg16[%c0_59, %c0_60] : memref<16x1xf32, #tpu.memory_space<vmem>>, vector<16x1xf32>
    %137 = arith.mulf %131, %136 : vector<16x1xf32>
    %cst_61 = arith.constant dense<0.000000e+00> : vector<16x1xf32>
    %138 = vector.multi_reduction <add>, %135, %cst_61 [0] : vector<4x16x1xf32> to vector<16x1xf32>
    %139 = arith.addf %137, %138 : vector<16x1xf32>
    %c0_62 = arith.constant 0 : index
    %c0_63 = arith.constant 0 : index
    %140 = vector.load %arg16[%c0_62, %c0_63] : memref<16x1xf32, #tpu.memory_space<vmem>>, vector<16x1xf32>
    tpu.vector_store %arg16[%c0_62, %c0_63], %139 {strides = array<i32>} : memref<16x1xf32, #tpu.memory_space<vmem>>, vector<16x1xf32>,
    %c0_64 = arith.constant 0 : index
    %c0_65 = arith.constant 0 : index
    %141 = vector.load %arg17[%c0_64, %c0_65] : memref<16x128xf32, #tpu.memory_space<vmem>>, vector<16x128xf32>
    %142 = vector.broadcast %131 : vector<16x1xf32> to vector<16x128xf32>
    %143 = arith.mulf %142, %141 : vector<16x128xf32>
    %144 = vector.broadcast %135 : vector<4x16x1xf32> to vector<4x16x128xf32>
    %145 = arith.mulf %144, %126 : vector<4x16x128xf32>
    %cst_66 = arith.constant dense<0.000000e+00> : vector<16x128xf32>
    %146 = vector.multi_reduction <add>, %145, %cst_66 [0] : vector<4x16x128xf32> to vector<16x128xf32>
    %147 = arith.addf %143, %146 : vector<16x128xf32>
    %c0_67 = arith.constant 0 : index
    %c0_68 = arith.constant 0 : index
    %148 = vector.load %arg17[%c0_67, %c0_68] : memref<16x128xf32, #tpu.memory_space<vmem>>, vector<16x128xf32>
    tpu.vector_store %arg17[%c0_67, %c0_68], %147 {strides = array<i32>} : memref<16x128xf32, #tpu.memory_space<vmem>>, vector<16x128xf32>,
    %c0_69 = arith.constant 0 : index
    %c0_70 = arith.constant 0 : index
    %149 = vector.load %arg15[%c0_69, %c0_70] : memref<16x1xf32, #tpu.memory_space<vmem>>, vector<16x1xf32>
    tpu.vector_store %arg15[%c0_69, %c0_70], %129 {strides = array<i32>} : memref<16x1xf32, #tpu.memory_space<vmem>>, vector<16x1xf32>,
    %c1_i32 = arith.constant 1 : i32
    %150 = arith.cmpi eq, %arg0, %c1_i32 : i32
    %151 = arith.extui %150 : i1 to i32
    %c0_i32_71 = arith.constant 0 : i32
    %152 = arith.cmpi ne, %151, %c0_i32_71 : i32
    scf.if %152 {
      %c0_72 = arith.constant 0 : index
      %c0_73 = arith.constant 0 : index
      %153 = vector.load %arg17[%c0_72, %c0_73] : memref<16x128xf32, #tpu.memory_space<vmem>>, vector<16x128xf32>
      %c0_74 = arith.constant 0 : index
      %c0_75 = arith.constant 0 : index
      %154 = vector.load %arg16[%c0_74, %c0_75] : memref<16x1xf32, #tpu.memory_space<vmem>>, vector<16x1xf32>
      %155 = tpu.reciprocal %154 {approx = true} : vector<16x1xf32> -> vector<16x1xf32>
      %156 = vector.broadcast %155 : vector<16x1xf32> to vector<16x128xf32>
      %157 = arith.mulf %153, %156 : vector<16x128xf32>
      %c0_76 = arith.constant 0 : index
      %c0_77 = arith.constant 0 : index
      %158 = vector.load %arg10[%c0_76, %c0_77] : memref<16x128xf32, #tpu.memory_space<vmem>>, vector<16x128xf32>
      tpu.vector_store %arg10[%c0_76, %c0_77], %157 {strides = array<i32>} : memref<16x128xf32, #tpu.memory_space<vmem>>, vector<16x128xf32>,
    } else {
    }
    return
  }
  func.func @transform_0(%arg0: i32) -> (i32, i32) {
    %c0_i32 = arith.constant 0 : i32
    %c0_i32_0 = arith.constant 0 : i32
    return %arg0, %c0_i32 : i32, i32
  }
  func.func @transform_1(%arg0: i32) -> (i32, i32) {
    %c0_i32 = arith.constant 0 : i32
    %c0_i32_0 = arith.constant 0 : i32
    %c0_i32_1 = arith.constant 0 : i32
    return %c0_i32, %c0_i32_0 : i32, i32
  }
  func.func @transform_2(%arg0: i32) -> (i32, i32) {
    %c0_i32 = arith.constant 0 : i32
    %c0_i32_0 = arith.constant 0 : i32
    %c0_i32_1 = arith.constant 0 : i32
    return %c0_i32, %c0_i32_0 : i32, i32
  }
  func.func @transform_3(%arg0: i32) -> (i32, i32) {
    %c0_i32 = arith.constant 0 : i32
    %c0_i32_0 = arith.constant 0 : i32
    %c0_i32_1 = arith.constant 0 : i32
    return %c0_i32, %c0_i32_0 : i32, i32
  }
  func.func @transform_4(%arg0: i32) -> (i32, i32) {
    %c0_i32 = arith.constant 0 : i32
    %c0_i32_0 = arith.constant 0 : i32
    %c0_i32_1 = arith.constant 0 : i32
    return %c0_i32, %c0_i32_0 : i32, i32
  }
  func.func @transform_5(%arg0: i32) -> (i32, i32) {
    %c0_i32 = arith.constant 0 : i32
    %c0_i32_0 = arith.constant 0 : i32
    %c0_i32_1 = arith.constant 0 : i32
    return %c0_i32, %c0_i32_0 : i32, i32
  }
  func.func @transform_6(%arg0: i32) -> (i32, i32) {
    %c0_i32 = arith.constant 0 : i32
    %c0_i32_0 = arith.constant 0 : i32
    %c0_i32_1 = arith.constant 0 : i32
    return %c0_i32, %c0_i32_0 : i32, i32
  }
  func.func @transform_7(%arg0: i32) -> (i32, i32) {
    %c0_i32 = arith.constant 0 : i32
    %c0_i32_0 = arith.constant 0 : i32
    %c0_i32_1 = arith.constant 0 : i32
    return %c0_i32, %c0_i32_0 : i32, i32
  }
  func.func @transform_8(%arg0: i32) -> (i32, i32) {
    %c0_i32 = arith.constant 0 : i32
    %c0_i32_0 = arith.constant 0 : i32
    %c0_i32_1 = arith.constant 0 : i32
    return %c0_i32, %c0_i32_0 : i32, i32
  }
  func.func @transform_9(%arg0: i32) -> (i32, i32) {
    %c0_i32 = arith.constant 0 : i32
    %c0_i32_0 = arith.constant 0 : i32
    %c0_i32_1 = arith.constant 0 : i32
    return %c0_i32, %c0_i32_0 : i32, i32
  }
}

</mosaic_0001>

<llo_original>
// kernel: tpu_custom_call.1
$region0: #{tpu_custom_call.1}
  #allocation0 [shape = 'u32[]', space=smem, size = 0x4, offset = 0x4, fixed_abs, tag = 'smem constant byte address 0x4 - core index']
  #allocation1 [shape = 'u32[144,128]{1,0:T(1,128)}', space=vmem, size = 0x12000, scoped, tag = 'internal scratch']
  #allocation2 [shape = 'f32[64,512]{1,0:T(8,128)}', space=vmem, size = 0x20000, scoped, tag = 'scratch operand']
  #allocation3 [shape = 'bf16[64,128]{1,0:T(16,128)(2,1)}', space=vmem, size = 0x4000, scoped, tag = 'scratch operand']
  #allocation4 [shape = 'f32[16,128]{1,0:T(8,128)}', space=vmem, size = 0x2000, scoped, tag = 'scratch operand']
  #allocation5 [shape = 'f32[16,128]{1,0:T(8,128)}', space=vmem, size = 0x2000, scoped, tag = 'scratch operand']
  #allocation6 [shape = 'f32[16,1]{1,0:T(8,128)}', space=vmem, size = 0x2000, scoped, tag = 'scratch operand']
  #allocation7 [shape = 'f32[16,1]{1,0:T(8,128)}', space=vmem, size = 0x2000, scoped, tag = 'scratch operand']
  #allocation8 [shape = 'f32[16,128]{1,0:T(8,128)}', space=vmem, size = 0x2000, scoped, tag = 'scratch operand']
  %s0 = inlined_call_operand.hbm [shape: bf16[128,128], index: 0, kind: input, shape index: {}]
  %s1 = inlined_call_operand.hbm [shape: bf16[128,512], index: 1, kind: input, shape index: {}]
  %s2 = inlined_call_operand.hbm [shape: bf16[128,512], index: 2, kind: input, shape index: {}]
  %s3 = inlined_call_operand.vmem [shape: f32[1,512], index: 3, kind: input, shape index: {}]
  %s4 = inlined_call_operand.hbm [shape: bf16[128,128], index: 4, kind: input, shape index: {}]
  %s5 = inlined_call_operand.vmem [shape: f32[1,128], index: 5, kind: input, shape index: {}]
  %s6 = inlined_call_operand.hbm [shape: bf16[128,128], index: 6, kind: input, shape index: {}]
  %s7 = inlined_call_operand.vmem [shape: f32[1,128], index: 7, kind: input, shape index: {}]
  %s8 = inlined_call_operand.vmem [shape: f32[1,128], index: 8, kind: input, shape index: {}]
  %s9 = inlined_call_operand.hbm [shape: f32[16,128], index: 9, kind: output, shape index: {}]
  %s10 = sld [smem:[#allocation0]]
  $region97: #{tpu_custom_call.1} parent=0
    _
  %s12 = ssub.s32 1, %s10
  %s13 = scalar_select 0, %s12, %s10
  $region1: #{tpu_custom_call.1} parent=0
    #allocation9 [shape = 'u8[32768]{0}', space=vmem, size = 0x8000, scoped, tag = 'input window, operand 0']
    #allocation10 [shape = 's32[2]{0}', space=sflag, size = 0x8, scoped, tag = 'scoped memory for tpu_custom_call.1']
    #allocation11 [shape = 's32[2]{0}', space=sflag, size = 0x8, scoped, tag = 'scoped memory for tpu_custom_call.1']
    #allocation12 [shape = 'u8[131072]{0}', space=vmem, size = 0x20000, scoped, tag = 'input window, operand 1, single buffered']
    #allocation13 [shape = 's32[1]{0}', space=sflag, size = 0x4, scoped, tag = 'scoped memory for tpu_custom_call.1']
    #allocation14 [shape = 'u8[131072]{0}', space=vmem, size = 0x20000, scoped, tag = 'input window, operand 2, single buffered']
    #allocation15 [shape = 'u8[32768]{0}', space=vmem, size = 0x8000, scoped, tag = 'input window, operand 4, single buffered']
    #allocation16 [shape = 's32[1]{0}', space=sflag, size = 0x4, scoped, tag = 'scoped memory for tpu_custom_call.1']
    #allocation17 [shape = 'u8[32768]{0}', space=vmem, size = 0x8000, scoped, tag = 'input window, operand 6, single buffered']
    #allocation18 [shape = 'u8[8192]{0}', space=vmem, size = 0x2000, scoped, tag = 'output window, operand 0, single buffered']
    %14 = vsyncpa [#allocation10], 0
    %s15 = scalar_lea.sflag [#allocation10], 1
    %16 = vsyncpa %s15, 0
    %17 = vsyncpa [#allocation13], 0
    %18 = vsyncpa [#allocation16], 0
    %19 = vsyncpa [#allocation11], 0
    loop: start=0, step=1, limit=4
    $region2: #{tpu_custom_call.1} parent=1 // loop_pre_header
      _
    $region3: #{tpu_custom_call.1} parent=1 // loop_header
      %s21 = sphi 0, %s25
      %p22 = scmp.ge.s32.totalorder %s21, 4
      %s31 = sphi 0, %s33
      %s34 = sphi 0, %s31
      %s35 = sphi 0, %s34
      %s51 = sphi 0, %s35
      %s55 = sphi 0, %s55
      %s57 = sphi 0, %s55
      %s58 = sphi 0, %s57
      %s72 = sphi 0, %s58
      %s76 = sphi 0, %s76
      %s78 = sphi 0, %s76
      %s79 = sphi 0, %s78
      %s93 = sphi 0, %s79
      %s97 = sphi 0, %s97
      %s99 = sphi 0, %s97
      %s100 = sphi 0, %s99
      %s114 = sphi 0, %s100
      %s118 = sphi 0, %s118
      %s120 = sphi 0, %s118
      %s121 = sphi 0, %s120
      %s135 = sphi 0, %s121
      %s139 = sphi 0, %s139
      %s141 = sphi 0, %s139
      %s142 = sphi 0, %s141
      %s156 = sphi 0, %s142
      %s160 = sphi 0, %s160
      %s162 = sphi 0, %s160
      %s163 = sphi 0, %s162
      %s177 = sphi 0, %s163
      %s181 = sphi 0, %s181
      %s183 = sphi 0, %s181
      %s184 = sphi 0, %s183
      %s198 = sphi 0, %s184
      %s202 = sphi 0, %s202
      %s204 = sphi 0, %s202
      %s205 = sphi 0, %s204
      %s219 = sphi 0, %s205
      %s223 = sphi 0, %s223
      %s225 = sphi 0, %s223
      %s226 = sphi 0, %s225
      %s240 = sphi 0, %s226
    $region4: #{tpu_custom_call.1} parent=1 // loop_header_branch
      %24 = sbr.rel (%p22) target = $region8
    $region5: #{tpu_custom_call.1} parent=1 // loop_body
      %s26 = ssub.s32 %s21, 1
      %s27 = ssub.s32 %s21, 2
      %s28 = sadd.s32 %s21, 1
      %s29 = ssub.s32 %s21, %s28
      %p30 = scmp.eq.s32.totalorder %s29, 0
      %s32 = sadd.s32 %s31, 1
      %s33 = scalar_select %p30, %s31, %s32
      %p36 = pneg %p30
      %p37 = scmp.eq.s32.totalorder %s21, 1
      %p38 = por %p36, %p37
      %p39 = scmp.ne.s32.totalorder %s31, %s34
      %p40 = scmp.eq.s32.totalorder %s21, 0
      %p41 = por %p39, %p40
      %p42 = scmp.ne.s32.totalorder %s31, %s34
      %p43 = scmp.eq.s32.totalorder %s26, 1
      %p44 = por %p42, %p43
      %p45 = scmp.ne.s32.totalorder %s34, %s35
      %p46 = scmp.eq.s32.totalorder %s26, 0
      %p47 = por %p45, %p46
      %p48 = scmp.ne.s32.totalorder %s34, %s35
      %p49 = scmp.eq.s32.totalorder %s27, 1
      %p50 = por %p48, %p49
      %p52 = scmp.ne.s32.totalorder %s35, %s51
      %p53 = scmp.eq.s32.totalorder %s27, 0
      %p54 = por %p52, %p53
      %s56 = sadd.s32 %s55, 1
      %p59 = scmp.eq.s32.totalorder %s21, 1
      %p60 = scmp.ne.s32.totalorder %s55, %s57
      %p61 = scmp.eq.s32.totalorder %s21, 0
      %p62 = por %p60, %p61
      %p63 = scmp.ne.s32.totalorder %s55, %s57
      %p64 = scmp.eq.s32.totalorder %s26, 1
      %p65 = por %p63, %p64
      %p66 = scmp.ne.s32.totalorder %s57, %s58
      %p67 = scmp.eq.s32.totalorder %s26, 0
      %p68 = por %p66, %p67
      %p69 = scmp.ne.s32.totalorder %s57, %s58
      %p70 = scmp.eq.s32.totalorder %s27, 1
      %p71 = por %p69, %p70
      %p73 = scmp.ne.s32.totalorder %s58, %s72
      %p74 = scmp.eq.s32.totalorder %s27, 0
      %p75 = por %p73, %p74
      %s77 = sadd.s32 %s76, 1
      %p80 = scmp.eq.s32.totalorder %s21, 1
      %p81 = scmp.ne.s32.totalorder %s76, %s78
      %p82 = scmp.eq.s32.totalorder %s21, 0
      %p83 = por %p81, %p82
      %p84 = scmp.ne.s32.totalorder %s76, %s78
      %p85 = scmp.eq.s32.totalorder %s26, 1
      %p86 = por %p84, %p85
      %p87 = scmp.ne.s32.totalorder %s78, %s79
      %p88 = scmp.eq.s32.totalorder %s26, 0
      %p89 = por %p87, %p88
      %p90 = scmp.ne.s32.totalorder %s78, %s79
      %p91 = scmp.eq.s32.totalorder %s27, 1
      %p92 = por %p90, %p91
      %p94 = scmp.ne.s32.totalorder %s79, %s93
      %p95 = scmp.eq.s32.totalorder %s27, 0
      %p96 = por %p94, %p95
      %s98 = sadd.s32 %s97, 1
      %p101 = scmp.eq.s32.totalorder %s21, 1
      %p102 = scmp.ne.s32.totalorder %s97, %s99
      %p103 = scmp.eq.s32.totalorder %s21, 0
      %p104 = por %p102, %p103
      %p105 = scmp.ne.s32.totalorder %s97, %s99
      %p106 = scmp.eq.s32.totalorder %s26, 1
      %p107 = por %p105, %p106
      %p108 = scmp.ne.s32.totalorder %s99, %s100
      %p109 = scmp.eq.s32.totalorder %s26, 0
      %p110 = por %p108, %p109
      %p111 = scmp.ne.s32.totalorder %s99, %s100
      %p112 = scmp.eq.s32.totalorder %s27, 1
      %p113 = por %p111, %p112
      %p115 = scmp.ne.s32.totalorder %s100, %s114
      %p116 = scmp.eq.s32.totalorder %s27, 0
      %p117 = por %p115, %p116
      %s119 = sadd.s32 %s118, 1
      %p122 = scmp.eq.s32.totalorder %s21, 1
      %p123 = scmp.ne.s32.totalorder %s118, %s120
      %p124 = scmp.eq.s32.totalorder %s21, 0
      %p125 = por %p123, %p124
      %p126 = scmp.ne.s32.totalorder %s118, %s120
      %p127 = scmp.eq.s32.totalorder %s26, 1
      %p128 = por %p126, %p127
      %p129 = scmp.ne.s32.totalorder %s120, %s121
      %p130 = scmp.eq.s32.totalorder %s26, 0
      %p131 = por %p129, %p130
      %p132 = scmp.ne.s32.totalorder %s120, %s121
      %p133 = scmp.eq.s32.totalorder %s27, 1
      %p134 = por %p132, %p133
      %p136 = scmp.ne.s32.totalorder %s121, %s135
      %p137 = scmp.eq.s32.totalorder %s27, 0
      %p138 = por %p136, %p137
      %s140 = sadd.s32 %s139, 1
      %p143 = scmp.eq.s32.totalorder %s21, 1
      %p144 = scmp.ne.s32.totalorder %s139, %s141
      %p145 = scmp.eq.s32.totalorder %s21, 0
      %p146 = por %p144, %p145
      %p147 = scmp.ne.s32.totalorder %s139, %s141
      %p148 = scmp.eq.s32.totalorder %s26, 1
      %p149 = por %p147, %p148
      %p150 = scmp.ne.s32.totalorder %s141, %s142
      %p151 = scmp.eq.s32.totalorder %s26, 0
      %p152 = por %p150, %p151
      %p153 = scmp.ne.s32.totalorder %s141, %s142
      %p154 = scmp.eq.s32.totalorder %s27, 1
      %p155 = por %p153, %p154
      %p157 = scmp.ne.s32.totalorder %s142, %s156
      %p158 = scmp.eq.s32.totalorder %s27, 0
      %p159 = por %p157, %p158
      %s161 = sadd.s32 %s160, 1
      %p164 = scmp.eq.s32.totalorder %s21, 1
      %p165 = scmp.ne.s32.totalorder %s160, %s162
      %p166 = scmp.eq.s32.totalorder %s21, 0
      %p167 = por %p165, %p166
      %p168 = scmp.ne.s32.totalorder %s160, %s162
      %p169 = scmp.eq.s32.totalorder %s26, 1
      %p170 = por %p168, %p169
      %p171 = scmp.ne.s32.totalorder %s162, %s163
      %p172 = scmp.eq.s32.totalorder %s26, 0
      %p173 = por %p171, %p172
      %p174 = scmp.ne.s32.totalorder %s162, %s163
      %p175 = scmp.eq.s32.totalorder %s27, 1
      %p176 = por %p174, %p175
      %p178 = scmp.ne.s32.totalorder %s163, %s177
      %p179 = scmp.eq.s32.totalorder %s27, 0
      %p180 = por %p178, %p179
      %s182 = sadd.s32 %s181, 1
      %p185 = scmp.eq.s32.totalorder %s21, 1
      %p186 = scmp.ne.s32.totalorder %s181, %s183
      %p187 = scmp.eq.s32.totalorder %s21, 0
      %p188 = por %p186, %p187
      %p189 = scmp.ne.s32.totalorder %s181, %s183
      %p190 = scmp.eq.s32.totalorder %s26, 1
      %p191 = por %p189, %p190
      %p192 = scmp.ne.s32.totalorder %s183, %s184
      %p193 = scmp.eq.s32.totalorder %s26, 0
      %p194 = por %p192, %p193
      %p195 = scmp.ne.s32.totalorder %s183, %s184
      %p196 = scmp.eq.s32.totalorder %s27, 1
      %p197 = por %p195, %p196
      %p199 = scmp.ne.s32.totalorder %s184, %s198
      %p200 = scmp.eq.s32.totalorder %s27, 0
      %p201 = por %p199, %p200
      %s203 = sadd.s32 %s202, 1
      %p206 = scmp.eq.s32.totalorder %s21, 1
      %p207 = scmp.ne.s32.totalorder %s202, %s204
      %p208 = scmp.eq.s32.totalorder %s21, 0
      %p209 = por %p207, %p208
      %p210 = scmp.ne.s32.totalorder %s202, %s204
      %p211 = scmp.eq.s32.totalorder %s26, 1
      %p212 = por %p210, %p211
      %p213 = scmp.ne.s32.totalorder %s204, %s205
      %p214 = scmp.eq.s32.totalorder %s26, 0
      %p215 = por %p213, %p214
      %p216 = scmp.ne.s32.totalorder %s204, %s205
      %p217 = scmp.eq.s32.totalorder %s27, 1
      %p218 = por %p216, %p217
      %p220 = scmp.ne.s32.totalorder %s205, %s219
      %p221 = scmp.eq.s32.totalorder %s27, 0
      %p222 = por %p220, %p221
      %s224 = sadd.s32 %s223, 1
      %p227 = scmp.eq.s32.totalorder %s21, 1
      %p228 = scmp.ne.s32.totalorder %s223, %s225
      %p229 = scmp.eq.s32.totalorder %s21, 0
      %p230 = por %p228, %p229
      %p231 = scmp.ne.s32.totalorder %s223, %s225
      %p232 = scmp.eq.s32.totalorder %s26, 1
      %p233 = por %p231, %p232
      %p234 = scmp.ne.s32.totalorder %s225, %s226
      %p235 = scmp.eq.s32.totalorder %s26, 0
      %p236 = por %p234, %p235
      %p237 = scmp.ne.s32.totalorder %s225, %s226
      %p238 = scmp.eq.s32.totalorder %s27, 1
      %p239 = por %p237, %p238
      %p241 = scmp.ne.s32.totalorder %s226, %s240
      %p242 = scmp.eq.s32.totalorder %s27, 0
      %p243 = por %p241, %p242
      %p244 = scmp.le.s32.totalorder 1, %s21
      %p245 = scmp.lt.s32.totalorder %s21, 3
      %p246 = pnand %p244, %p245
      %p247 = pneg %p246
      // Predicated region
      $region9: #{tpu_custom_call.1} parent=5 // pred_check
        _
      $region10: #{tpu_custom_call.1} parent=5 // pred_check_branch
        %249 = sbr.rel (%p246) target = $region12
      $region11: #{tpu_custom_call.1} parent=5 // pred_region
        %s250 = ssub.s32 %s21, 1
        // Predicated region
        $region13: #{tpu_custom_call.1} parent=11 // pred_check
          %p251 = pneg %p68
        $region14: #{tpu_custom_call.1} parent=11 // pred_check_branch
          %253 = sbr.rel (%p251) target = $region16
        $region15: #{tpu_custom_call.1} parent=11 // pred_region
          %s255 = ssub.s32 4096, 4096
          %256 = vsyncadd [#allocation13], %s255
          %s257 = sshll.u32 [#allocation12], 4
          %s258 = int_to_ptr.vmem [resolvable:$true] %s257
          %263 = dma.hbm_to_vmem [thread:$0]  %s1, 4096, %s258, [#allocation13], 256, 256, 16
        $region16: #{tpu_custom_call.1} parent=11 // pred_fallthru
          _
        // Predicated region
        $region17: #{tpu_custom_call.1} parent=11 // pred_check
          %p264 = pneg %p89
        $region18: #{tpu_custom_call.1} parent=11 // pred_check_branch
          %266 = sbr.rel (%p264) target = $region20
        $region19: #{tpu_custom_call.1} parent=11 // pred_region
          %s268 = ssub.s32 4096, 4096
          %269 = vsyncadd [#allocation13], %s268
          %s270 = sshll.u32 [#allocation14], 4
          %s271 = int_to_ptr.vmem [resolvable:$true] %s270
          %276 = dma.hbm_to_vmem [thread:$0]  %s2, 4096, %s271, [#allocation13], 256, 256, 16
        $region20: #{tpu_custom_call.1} parent=11 // pred_fallthru
          _
        // Predicated region
        $region21: #{tpu_custom_call.1} parent=11 // pred_check
          %p277 = pneg %p110
        $region22: #{tpu_custom_call.1} parent=11 // pred_check_branch
          %279 = sbr.rel (%p277) target = $region24
        $region23: #{tpu_custom_call.1} parent=11 // pred_region
          _
        $region24: #{tpu_custom_call.1} parent=11 // pred_fallthru
          _
        // Predicated region
        $region25: #{tpu_custom_call.1} parent=11 // pred_check
          %p280 = pneg %p131
        $region26: #{tpu_custom_call.1} parent=11 // pred_check_branch
          %282 = sbr.rel (%p280) target = $region28
        $region27: #{tpu_custom_call.1} parent=11 // pred_region
          %s284 = ssub.s32 1024, 1024
          %285 = vsyncadd [#allocation16], %s284
          %s286 = sshll.u32 [#allocation15], 4
          %s287 = int_to_ptr.vmem [resolvable:$true] %s286
          %292 = dma.hbm_to_vmem [thread:$0]  %s4, 1024, %s287, [#allocation16], 64, 64, 4
        $region28: #{tpu_custom_call.1} parent=11 // pred_fallthru
          _
        // Predicated region
        $region29: #{tpu_custom_call.1} parent=11 // pred_check
          %p293 = pneg %p152
        $region30: #{tpu_custom_call.1} parent=11 // pred_check_branch
          %295 = sbr.rel (%p293) target = $region32
        $region31: #{tpu_custom_call.1} parent=11 // pred_region
          _
        $region32: #{tpu_custom_call.1} parent=11 // pred_fallthru
          _
        // Predicated region
        $region33: #{tpu_custom_call.1} parent=11 // pred_check
          %p296 = pneg %p173
        $region34: #{tpu_custom_call.1} parent=11 // pred_check_branch
          %298 = sbr.rel (%p296) target = $region36
        $region35: #{tpu_custom_call.1} parent=11 // pred_region
          %s300 = ssub.s32 1024, 1024
          %301 = vsyncadd [#allocation16], %s300
          %s302 = sshll.u32 [#allocation17], 4
          %s303 = int_to_ptr.vmem [resolvable:$true] %s302
          %308 = dma.hbm_to_vmem [thread:$0]  %s6, 1024, %s303, [#allocation16], 64, 64, 4
        $region36: #{tpu_custom_call.1} parent=11 // pred_fallthru
          _
        // Predicated region
        $region37: #{tpu_custom_call.1} parent=11 // pred_check
          %p309 = pneg %p194
        $region38: #{tpu_custom_call.1} parent=11 // pred_check_branch
          %311 = sbr.rel (%p309) target = $region40
        $region39: #{tpu_custom_call.1} parent=11 // pred_region
          _
        $region40: #{tpu_custom_call.1} parent=11 // pred_fallthru
          _
        // Predicated region
        $region41: #{tpu_custom_call.1} parent=11 // pred_check
          %p312 = pneg %p215
        $region42: #{tpu_custom_call.1} parent=11 // pred_check_branch
          %314 = sbr.rel (%p312) target = $region44
        $region43: #{tpu_custom_call.1} parent=11 // pred_region
          _
        $region44: #{tpu_custom_call.1} parent=11 // pred_fallthru
          _
      $region12: #{tpu_custom_call.1} parent=5 // pred_fallthru
        _
      %p315 = scmp.lt.s32.totalorder %s21, 2
      // Predicated region
      $region45: #{tpu_custom_call.1} parent=5 // pred_check
        %p316 = pneg %p315
      $region46: #{tpu_custom_call.1} parent=5 // pred_check_branch
        %318 = sbr.rel (%p316) target = $region48
      $region47: #{tpu_custom_call.1} parent=5 // pred_region
        // Predicated region
        $region49: #{tpu_custom_call.1} parent=47 // pred_check
          %p319 = pneg %p41
        $region50: #{tpu_custom_call.1} parent=47 // pred_check_branch
          %321 = sbr.rel (%p319) target = $region52
        $region51: #{tpu_custom_call.1} parent=47 // pred_region
          %s322 = sand.u32 %s31, 1
          %s323 = scalar_lea.sflag [#allocation10], %s322
          %s324 = sand.u32 %s31, 1
          %s325 = smul.addr %s324, 32
          %s326 = scalar_lea.vmem [#allocation9], %s325
          %s327 = smul.u32 8, %s21
          %s329 = ssub.s32 512, 512
          %330 = vsyncadd %s323, %s329
          %s331 = smul.addr %s327, 64
          %s332 = scalar_lea.hbm %s0, %s331
          %s333 = sshll.u32 %s326, 4
          %s334 = int_to_ptr.vmem [resolvable:$true] %s333
          %339 = dma.hbm_to_vmem [thread:$0]  %s332, 512, %s334, %s323, 64, 64, 4
        $region52: #{tpu_custom_call.1} parent=47 // pred_fallthru
          _
      $region48: #{tpu_custom_call.1} parent=5 // pred_fallthru
        _
      %p340 = scmp.le.s32.totalorder 1, %s21
      %p341 = scmp.lt.s32.totalorder %s21, 3
      %p342 = pnand %p340, %p341
      %p343 = pneg %p342
      // Predicated region
      $region53: #{tpu_custom_call.1} parent=5 // pred_check
        _
      $region54: #{tpu_custom_call.1} parent=5 // pred_check_branch
        %345 = sbr.rel (%p342) target = $region56
      $region55: #{tpu_custom_call.1} parent=5 // pred_region
        %s346 = ssub.s32 %s21, 1
        %s347 = sand.u32 %s34, 1
        %s348 = scalar_lea.sflag [#allocation10], %s347
        %s349 = sand.u32 %s34, 1
        %s350 = smul.addr %s349, 32
        %s351 = scalar_lea.vmem [#allocation9], %s350
        // Predicated region
        $region57: #{tpu_custom_call.1} parent=55 // pred_check
          %p352 = pneg %p47
        $region58: #{tpu_custom_call.1} parent=55 // pred_check_branch
          %354 = sbr.rel (%p352) target = $region60
        $region59: #{tpu_custom_call.1} parent=55 // pred_region
          %355 = dma.done %s348, 512
        $region60: #{tpu_custom_call.1} parent=55 // pred_fallthru
          _
        // Predicated region
        $region61: #{tpu_custom_call.1} parent=55 // pred_check
          %p356 = pneg %p68
        $region62: #{tpu_custom_call.1} parent=55 // pred_check_branch
          %358 = sbr.rel (%p356) target = $region64
        $region63: #{tpu_custom_call.1} parent=55 // pred_region
          %359 = dma.done [#allocation13], 4096
        $region64: #{tpu_custom_call.1} parent=55 // pred_fallthru
          _
        // Predicated region
        $region65: #{tpu_custom_call.1} parent=55 // pred_check
          %p360 = pneg %p89
        $region66: #{tpu_custom_call.1} parent=55 // pred_check_branch
          %362 = sbr.rel (%p360) target = $region68
        $region67: #{tpu_custom_call.1} parent=55 // pred_region
          %363 = dma.done [#allocation13], 4096
        $region68: #{tpu_custom_call.1} parent=55 // pred_fallthru
          _
        // Predicated region
        $region69: #{tpu_custom_call.1} parent=55 // pred_check
          %p364 = pneg %p131
        $region70: #{tpu_custom_call.1} parent=55 // pred_check_branch
          %366 = sbr.rel (%p364) target = $region72
        $region71: #{tpu_custom_call.1} parent=55 // pred_region
          %367 = dma.done [#allocation16], 1024
        $region72: #{tpu_custom_call.1} parent=55 // pred_fallthru
          _
        // Predicated region
        $region73: #{tpu_custom_call.1} parent=55 // pred_check
          %p368 = pneg %p173
        $region74: #{tpu_custom_call.1} parent=55 // pred_check_branch
          %370 = sbr.rel (%p368) target = $region76
        $region75: #{tpu_custom_call.1} parent=55 // pred_region
          %371 = dma.done [#allocation16], 1024
        $region76: #{tpu_custom_call.1} parent=55 // pred_fallthru
          _
        %s372 = sand.u32 %s34, 1
        %s373 = scalar_lea.sflag [#allocation10], %s372
        %s374 = sand.u32 %s34, 1
        %s375 = smul.addr %s374, 32
        %s376 = scalar_lea.vmem [#allocation9], %s375
        %p377 = pneg %p47
        %p378 = pneg %p44
        %p379 = pneg %p68
        %p380 = pneg %p65
        %p381 = pneg %p89
        %p382 = pneg %p86
        %p383 = pneg %p110
        %p384 = pneg %p107
        %p385 = pneg %p131
        %p386 = pneg %p128
        %p387 = pneg %p152
        %p388 = pneg %p149
        %p389 = pneg %p173
        %p390 = pneg %p170
        %p391 = pneg %p194
        %p392 = pneg %p191
        %p393 = pneg %p215
        %p394 = pneg %p212
        %p395 = pneg %p236
        %p396 = pneg %p233
        %s397 = smul.u32 8, %s26
        %p399 = scmp.eq.s32.totalorder %s26, 0
        // Predicated region
        $region77: #{tpu_custom_call.1} parent=55 // pred_check
          %p400 = pneg %p399
        $region78: #{tpu_custom_call.1} parent=55 // pred_check_branch
          %402 = sbr.rel (%p400) target = $region80
        $region79: #{tpu_custom_call.1} parent=55 // pred_region
          %403 = vst [vmem:[#allocation4] sm:$0xff] 0.0
          %404 = vst [vmem:[#allocation4 + $0x8] sm:$0xff] 0.0
          %405 = vst [vmem:[#allocation5] sm:$0xff] 0.0
          %406 = vst [vmem:[#allocation5 + $0x8] sm:$0xff] 0.0
          %vm407 = vcmask 7168
          %408 = vst.msk [vmem:[#allocation6] sm:$0xff] %vm407, -inf
          %409 = vst.msk [vmem:[#allocation6 + $0x8] sm:$0xff] %vm407, -inf
          %410 = vst.msk [vmem:[#allocation7] sm:$0xff] %vm407, 0.0
          %411 = vst.msk [vmem:[#allocation7 + $0x8] sm:$0xff] %vm407, 0.0
          %412 = vst [vmem:[#allocation8] sm:$0xff] 0.0
          %413 = vst [vmem:[#allocation8 + $0x8] sm:$0xff] 0.0
        $region80: #{tpu_custom_call.1} parent=55 // pred_fallthru
          _
        %v414 = vld [vmem:[%s351] sm:$0xf]
        %v415 = vld [vmem:[%s351 + $0x4] sm:$0xf]
        %v416 = vld [vmem:[%s351 + $0x8] sm:$0xf]
        %v417 = vld [vmem:[%s351 + $0xc] sm:$0xf]
        %v418 = vld [vmem:[%s351 + $0x10] sm:$0xf]
        %v419 = vld [vmem:[%s351 + $0x14] sm:$0xf]
        %v420 = vld [vmem:[%s351 + $0x18] sm:$0xf]
        %v421 = vld [vmem:[%s351 + $0x1c] sm:$0xf]
        %v422 = vld [vmem:[#allocation12] sm:$0xff]
        %v423 = vld [vmem:[#allocation12 + $0x8] sm:$0xff]
        %v424 = vld [vmem:[#allocation12 + $0x10] sm:$0xff]
        %v425 = vld [vmem:[#allocation12 + $0x18] sm:$0xff]
        %v426 = vld [vmem:[#allocation12 + $0x20] sm:$0xff]
        %v427 = vld [vmem:[#allocation12 + $0x28] sm:$0xff]
        %v428 = vld [vmem:[#allocation12 + $0x30] sm:$0xff]
        %v429 = vld [vmem:[#allocation12 + $0x38] sm:$0xff]
        %v430 = vld [vmem:[#allocation12 + $0x40] sm:$0xff]
        %v431 = vld [vmem:[#allocation12 + $0x48] sm:$0xff]
        %v432 = vld [vmem:[#allocation12 + $0x50] sm:$0xff]
        %v433 = vld [vmem:[#allocation12 + $0x58] sm:$0xff]
        %v434 = vld [vmem:[#allocation12 + $0x60] sm:$0xff]
        %v435 = vld [vmem:[#allocation12 + $0x68] sm:$0xff]
        %v436 = vld [vmem:[#allocation12 + $0x70] sm:$0xff]
        %v437 = vld [vmem:[#allocation12 + $0x78] sm:$0xff]
        %v438 = vld [vmem:[#allocation12 + $0x80] sm:$0xff]
        %v439 = vld [vmem:[#allocation12 + $0x88] sm:$0xff]
        %v440 = vld [vmem:[#allocation12 + $0x90] sm:$0xff]
        %v441 = vld [vmem:[#allocation12 + $0x98] sm:$0xff]
        %v442 = vld [vmem:[#allocation12 + $0xa0] sm:$0xff]
        %v443 = vld [vmem:[#allocation12 + $0xa8] sm:$0xff]
        %v444 = vld [vmem:[#allocation12 + $0xb0] sm:$0xff]
        %v445 = vld [vmem:[#allocation12 + $0xb8] sm:$0xff]
        %v446 = vld [vmem:[#allocation12 + $0xc0] sm:$0xff]
        %v447 = vld [vmem:[#allocation12 + $0xc8] sm:$0xff]
        %v448 = vld [vmem:[#allocation12 + $0xd0] sm:$0xff]
        %v449 = vld [vmem:[#allocation12 + $0xd8] sm:$0xff]
        %v450 = vld [vmem:[#allocation12 + $0xe0] sm:$0xff]
        %v451 = vld [vmem:[#allocation12 + $0xe8] sm:$0xff]
        %v452 = vld [vmem:[#allocation12 + $0xf0] sm:$0xff]
        %v453 = vld [vmem:[#allocation12 + $0xf8] sm:$0xff]
        %v454 = vld [vmem:[%s3] sm:$0xf]
        %v456 = vlaneseq
        %v457 = vshrl.u32 %v456, 7
        %v458 = vsub.s32 0, %v457
        %v459 = vrot.slane %v454, %v458
        %v460 = vlaneseq
        %v461 = vshrl.u32 %v460, 7
        %v462 = vsub.s32 1, %v461
        %v463 = vrot.slane %v454, %v462
        %v464 = vlaneseq
        %v465 = vshrl.u32 %v464, 7
        %v466 = vsub.s32 2, %v465
        %v467 = vrot.slane %v454, %v466
        %v468 = vlaneseq
        %v469 = vshrl.u32 %v468, 7
        %v470 = vsub.s32 3, %v469
        %v471 = vrot.slane %v454, %v470
        %v484 = vunpack.c.l.b16 %v414
        %v485 = vunpack.c.l.b16 %v415
        %v486 = vunpack.c.l.b16 %v416
        %v487 = vunpack.c.l.b16 %v417
        %v488 = vunpack.c.l.b16 %v418
        %v489 = vunpack.c.l.b16 %v419
        %v490 = vunpack.c.l.b16 %v420
        %v491 = vunpack.c.l.b16 %v421
        %v492 = vpack.c.b16 %v485, %v484
        %v493 = vpack.c.b16 %v487, %v486
        %v494 = vpack.c.b16 %v489, %v488
        %v495 = vpack.c.b16 %v491, %v490
        %v532 = vunpack.c.l.b16 %v422
        %v533 = vunpack.c.h.b16 %v422
        %v534 = vunpack.c.l.b16 %v423
        %v535 = vunpack.c.h.b16 %v423
        %v536 = vunpack.c.l.b16 %v424
        %v537 = vunpack.c.h.b16 %v424
        %v538 = vunpack.c.l.b16 %v425
        %v539 = vunpack.c.h.b16 %v425
        %v540 = vunpack.c.l.b16 %v426
        %v541 = vunpack.c.h.b16 %v426
        %v542 = vunpack.c.l.b16 %v427
        %v543 = vunpack.c.h.b16 %v427
        %v544 = vunpack.c.l.b16 %v428
        %v545 = vunpack.c.h.b16 %v428
        %v546 = vunpack.c.l.b16 %v429
        %v547 = vunpack.c.h.b16 %v429
        %v548 = vunpack.c.l.b16 %v430
        %v549 = vunpack.c.h.b16 %v430
        %v550 = vunpack.c.l.b16 %v431
        %v551 = vunpack.c.h.b16 %v431
        %v552 = vunpack.c.l.b16 %v432
        %v553 = vunpack.c.h.b16 %v432
        %v554 = vunpack.c.l.b16 %v433
        %v555 = vunpack.c.h.b16 %v433
        %v556 = vunpack.c.l.b16 %v434
        %v557 = vunpack.c.h.b16 %v434
        %v558 = vunpack.c.l.b16 %v435
        %v559 = vunpack.c.h.b16 %v435
        %v560 = vunpack.c.l.b16 %v436
        %v561 = vunpack.c.h.b16 %v436
        %v562 = vunpack.c.l.b16 %v437
        %v563 = vunpack.c.h.b16 %v437
        %v564 = vunpack.c.l.b16 %v438
        %v565 = vunpack.c.h.b16 %v438
        %v566 = vunpack.c.l.b16 %v439
        %v567 = vunpack.c.h.b16 %v439
        %v568 = vunpack.c.l.b16 %v440
        %v569 = vunpack.c.h.b16 %v440
        %v570 = vunpack.c.l.b16 %v441
        %v571 = vunpack.c.h.b16 %v441
        %v572 = vunpack.c.l.b16 %v442
        %v573 = vunpack.c.h.b16 %v442
        %v574 = vunpack.c.l.b16 %v443
        %v575 = vunpack.c.h.b16 %v443
        %v576 = vunpack.c.l.b16 %v444
        %v577 = vunpack.c.h.b16 %v444
        %v578 = vunpack.c.l.b16 %v445
        %v579 = vunpack.c.h.b16 %v445
        %v580 = vunpack.c.l.b16 %v446
        %v581 = vunpack.c.h.b16 %v446
        %v582 = vunpack.c.l.b16 %v447
        %v583 = vunpack.c.h.b16 %v447
        %v584 = vunpack.c.l.b16 %v448
        %v585 = vunpack.c.h.b16 %v448
        %v586 = vunpack.c.l.b16 %v449
        %v587 = vunpack.c.h.b16 %v449
        %v588 = vunpack.c.l.b16 %v450
        %v589 = vunpack.c.h.b16 %v450
        %v590 = vunpack.c.l.b16 %v451
        %v591 = vunpack.c.h.b16 %v451
        %v592 = vunpack.c.l.b16 %v452
        %v593 = vunpack.c.h.b16 %v452
        %v594 = vunpack.c.l.b16 %v453
        %v595 = vunpack.c.h.b16 %v453
        %v596 = vpack.c.b16 %v536, %v532
        %v597 = vpack.c.b16 %v537, %v533
        %v598 = vpack.c.b16 %v538, %v534
        %v599 = vpack.c.b16 %v539, %v535
        %v600 = vpack.c.b16 %v544, %v540
        %v601 = vpack.c.b16 %v545, %v541
        %v602 = vpack.c.b16 %v546, %v542
        %v603 = vpack.c.b16 %v547, %v543
        %v604 = vpack.c.b16 %v552, %v548
        %v605 = vpack.c.b16 %v553, %v549
        %v606 = vpack.c.b16 %v554, %v550
        %v607 = vpack.c.b16 %v555, %v551
        %v608 = vpack.c.b16 %v560, %v556
        %v609 = vpack.c.b16 %v561, %v557
        %v610 = vpack.c.b16 %v562, %v558
        %v611 = vpack.c.b16 %v563, %v559
        %v612 = vpack.c.b16 %v568, %v564
        %v613 = vpack.c.b16 %v569, %v565
        %v614 = vpack.c.b16 %v570, %v566
        %v615 = vpack.c.b16 %v571, %v567
        %v616 = vpack.c.b16 %v576, %v572
        %v617 = vpack.c.b16 %v577, %v573
        %v618 = vpack.c.b16 %v578, %v574
        %v619 = vpack.c.b16 %v579, %v575
        %v620 = vpack.c.b16 %v584, %v580
        %v621 = vpack.c.b16 %v585, %v581
        %v622 = vpack.c.b16 %v586, %v582
        %v623 = vpack.c.b16 %v587, %v583
        %v624 = vpack.c.b16 %v592, %v588
        %v625 = vpack.c.b16 %v593, %v589
        %v626 = vpack.c.b16 %v594, %v590
        %v627 = vpack.c.b16 %v595, %v591
        %660 = vmatprep.subr.bf16.mxu0 %v597
        %661 = vmatpush1.bf16.msra.mxu0 %v596
        %662 = vmatprep.subr.bf16.mxu0 %v601
        %663 = vmatpush1.bf16.msra.mxu0 %v600
        %664 = vmatprep.subr.bf16.mxu0 %v605
        %665 = vmatpush1.bf16.msra.mxu0 %v604
        %666 = vmatprep.subr.bf16.mxu0 %v609
        %667 = vmatpush1.bf16.msra.mxu0 %v608
        %668 = vmatprep.subr.bf16.mxu0 %v613
        %669 = vmatpush1.bf16.msra.mxu0 %v612
        %670 = vmatprep.subr.bf16.mxu0 %v617
        %671 = vmatpush1.bf16.msra.mxu0 %v616
        %672 = vmatprep.subr.bf16.mxu0 %v621
        %673 = vmatpush1.bf16.msra.mxu0 %v620
        %674 = vmatprep.subr.bf16.mxu0 %v625
        %675 = vmatpush1.bf16.msra.mxu0 %v624
        %676 = vmatprep.subr.bf16.mxu0 0
        %677 = vmatpush1.bf16.msra.mxu0 0
        %678 = vmatprep.subr.bf16.mxu0 0
        %679 = vmatpush1.bf16.msra.mxu0 0
        %680 = vmatprep.subr.bf16.mxu0 0
        %681 = vmatpush1.bf16.msra.mxu0 0
        %682 = vmatprep.subr.bf16.mxu0 0
        %683 = vmatpush1.bf16.msra.mxu0 0
        %684 = vmatprep.subr.bf16.mxu0 0
        %685 = vmatpush1.bf16.msra.mxu0 0
        %686 = vmatprep.subr.bf16.mxu0 0
        %687 = vmatpush1.bf16.msra.mxu0 0
        %688 = vmatprep.subr.bf16.mxu0 0
        %689 = vmatpush1.bf16.msra.mxu0 0
        %690 = vmatprep.subr.bf16.mxu0 0
        %691 = vmatpush1.bf16.msra.mxu0 0
        %692 = vmatprep.mubr.bf16.mxu0 0
        %693 = vmatmul.mubr.bf16.gmra.mrb[0].mxu0 %v492
        %v694 = vpop.f32.mrb[0].mxu0
        %v695 = vadd.f32 %v459, %v694
        %v696 = vpop.f32.mrb[0].mxu0
        %v697 = vadd.f32 %v463, %v696
        %v698 = vpop.f32.mrb[0].mxu0
        %v699 = vadd.f32 %v459, %v698
        %v700 = vpop.f32.mrb[0].mxu0
        %v701 = vadd.f32 %v463, %v700
        %702 = vmatprep.mubr.bf16.mxu0 0
        %703 = vmatmul.mubr.bf16.gmra.mrb[0].mxu0 %v493
        %v704 = vpop.f32.mrb[0].mxu0
        %v705 = vadd.f32 %v459, %v704
        %v706 = vpop.f32.mrb[0].mxu0
        %v707 = vadd.f32 %v463, %v706
        %v708 = vpop.f32.mrb[0].mxu0
        %v709 = vadd.f32 %v459, %v708
        %v710 = vpop.f32.mrb[0].mxu0
        %v711 = vadd.f32 %v463, %v710
        %712 = vmatprep.mubr.bf16.mxu0 0
        %713 = vmatmul.mubr.bf16.gmra.mrb[0].mxu0 %v494
        %v714 = vpop.f32.mrb[0].mxu0
        %v715 = vadd.f32 %v459, %v714
        %v716 = vpop.f32.mrb[0].mxu0
        %v717 = vadd.f32 %v463, %v716
        %v718 = vpop.f32.mrb[0].mxu0
        %v719 = vadd.f32 %v459, %v718
        %v720 = vpop.f32.mrb[0].mxu0
        %v721 = vadd.f32 %v463, %v720
        %722 = vmatprep.mubr.bf16.mxu0 0
        %723 = vmatmul.mubr.bf16.gmra.mrb[0].mxu0 %v495
        %v724 = vpop.f32.mrb[0].mxu0
        %v725 = vadd.f32 %v459, %v724
        %v726 = vpop.f32.mrb[0].mxu0
        %v727 = vadd.f32 %v463, %v726
        %v728 = vpop.f32.mrb[0].mxu0
        %v729 = vadd.f32 %v459, %v728
        %v730 = vpop.f32.mrb[0].mxu0
        %v731 = vadd.f32 %v463, %v730
        %732 = vdwg.mxu0
        %733 = vmatprep.subr.bf16.mxu0 %v599
        %734 = vmatpush1.bf16.msra.mxu0 %v598
        %735 = vmatprep.subr.bf16.mxu0 %v603
        %736 = vmatpush1.bf16.msra.mxu0 %v602
        %737 = vmatprep.subr.bf16.mxu0 %v607
        %738 = vmatpush1.bf16.msra.mxu0 %v606
        %739 = vmatprep.subr.bf16.mxu0 %v611
        %740 = vmatpush1.bf16.msra.mxu0 %v610
        %741 = vmatprep.subr.bf16.mxu0 %v615
        %742 = vmatpush1.bf16.msra.mxu0 %v614
        %743 = vmatprep.subr.bf16.mxu0 %v619
        %744 = vmatpush1.bf16.msra.mxu0 %v618
        %745 = vmatprep.subr.bf16.mxu0 %v623
        %746 = vmatpush1.bf16.msra.mxu0 %v622
        %747 = vmatprep.subr.bf16.mxu0 %v627
        %748 = vmatpush1.bf16.msra.mxu0 %v626
        %749 = vmatprep.subr.bf16.mxu0 0
        %750 = vmatpush1.bf16.msra.mxu0 0
        %751 = vmatprep.subr.bf16.mxu0 0
        %752 = vmatpush1.bf16.msra.mxu0 0
        %753 = vmatprep.subr.bf16.mxu0 0
        %754 = vmatpush1.bf16.msra.mxu0 0
        %755 = vmatprep.subr.bf16.mxu0 0
        %756 = vmatpush1.bf16.msra.mxu0 0
        %757 = vmatprep.subr.bf16.mxu0 0
        %758 = vmatpush1.bf16.msra.mxu0 0
        %759 = vmatprep.subr.bf16.mxu0 0
        %760 = vmatpush1.bf16.msra.mxu0 0
        %761 = vmatprep.subr.bf16.mxu0 0
        %762 = vmatpush1.bf16.msra.mxu0 0
        %763 = vmatprep.subr.bf16.mxu0 0
        %764 = vmatpush1.bf16.msra.mxu0 0
        %765 = vmatprep.mubr.bf16.mxu0 0
        %766 = vmatmul.mubr.bf16.gmra.mrb[0].mxu0 %v492
        %v767 = vpop.f32.mrb[0].mxu0
        %v768 = vadd.f32 %v467, %v767
        %v769 = vpop.f32.mrb[0].mxu0
        %v770 = vadd.f32 %v471, %v769
        %v771 = vpop.f32.mrb[0].mxu0
        %v772 = vadd.f32 %v467, %v771
        %v773 = vpop.f32.mrb[0].mxu0
        %v774 = vadd.f32 %v471, %v773
        %775 = vmatprep.mubr.bf16.mxu0 0
        %776 = vmatmul.mubr.bf16.gmra.mrb[0].mxu0 %v493
        %v777 = vpop.f32.mrb[0].mxu0
        %v778 = vadd.f32 %v467, %v777
        %v779 = vpop.f32.mrb[0].mxu0
        %v780 = vadd.f32 %v471, %v779
        %v781 = vpop.f32.mrb[0].mxu0
        %v782 = vadd.f32 %v467, %v781
        %v783 = vpop.f32.mrb[0].mxu0
        %v784 = vadd.f32 %v471, %v783
        %785 = vmatprep.mubr.bf16.mxu0 0
        %786 = vmatmul.mubr.bf16.gmra.mrb[0].mxu0 %v494
        %v787 = vpop.f32.mrb[0].mxu0
        %v788 = vadd.f32 %v467, %v787
        %v789 = vpop.f32.mrb[0].mxu0
        %v790 = vadd.f32 %v471, %v789
        %v791 = vpop.f32.mrb[0].mxu0
        %v792 = vadd.f32 %v467, %v791
        %v793 = vpop.f32.mrb[0].mxu0
        %v794 = vadd.f32 %v471, %v793
        %795 = vmatprep.mubr.bf16.mxu0 0
        %796 = vmatmul.mubr.bf16.gmra.mrb[0].mxu0 %v495
        %v797 = vpop.f32.mrb[0].mxu0
        %v798 = vadd.f32 %v467, %v797
        %v799 = vpop.f32.mrb[0].mxu0
        %v800 = vadd.f32 %v471, %v799
        %v801 = vpop.f32.mrb[0].mxu0
        %v802 = vadd.f32 %v467, %v801
        %v803 = vpop.f32.mrb[0].mxu0
        %v804 = vadd.f32 %v471, %v803
        %805 = vdwg.mxu0
        %806 = vst [vmem:[#allocation2] sm:$0xff] %v695
        %807 = vst [vmem:[#allocation2 + $0x8] sm:$0xff] %v697
        %808 = vst [vmem:[#allocation2 + $0x10] sm:$0xff] %v768
        %809 = vst [vmem:[#allocation2 + $0x18] sm:$0xff] %v770
        %810 = vst [vmem:[#allocation2 + $0x20] sm:$0xff] %v699
        %811 = vst [vmem:[#allocation2 + $0x28] sm:$0xff] %v701
        %812 = vst [vmem:[#allocation2 + $0x30] sm:$0xff] %v772
        %813 = vst [vmem:[#allocation2 + $0x38] sm:$0xff] %v774
        %814 = vst [vmem:[#allocation2 + $0x40] sm:$0xff] %v705
        %815 = vst [vmem:[#allocation2 + $0x48] sm:$0xff] %v707
        %816 = vst [vmem:[#allocation2 + $0x50] sm:$0xff] %v778
        %817 = vst [vmem:[#allocation2 + $0x58] sm:$0xff] %v780
        %818 = vst [vmem:[#allocation2 + $0x60] sm:$0xff] %v709
        %819 = vst [vmem:[#allocation2 + $0x68] sm:$0xff] %v711
        %820 = vst [vmem:[#allocation2 + $0x70] sm:$0xff] %v782
        %821 = vst [vmem:[#allocation2 + $0x78] sm:$0xff] %v784
        %822 = vst [vmem:[#allocation2 + $0x80] sm:$0xff] %v715
        %823 = vst [vmem:[#allocation2 + $0x88] sm:$0xff] %v717
        %824 = vst [vmem:[#allocation2 + $0x90] sm:$0xff] %v788
        %825 = vst [vmem:[#allocation2 + $0x98] sm:$0xff] %v790
        %826 = vst [vmem:[#allocation2 + $0xa0] sm:$0xff] %v719
        %827 = vst [vmem:[#allocation2 + $0xa8] sm:$0xff] %v721
        %828 = vst [vmem:[#allocation2 + $0xb0] sm:$0xff] %v792
        %829 = vst [vmem:[#allocation2 + $0xb8] sm:$0xff] %v794
        %830 = vst [vmem:[#allocation2 + $0xc0] sm:$0xff] %v725
        %831 = vst [vmem:[#allocation2 + $0xc8] sm:$0xff] %v727
        %832 = vst [vmem:[#allocation2 + $0xd0] sm:$0xff] %v798
        %833 = vst [vmem:[#allocation2 + $0xd8] sm:$0xff] %v800
        %834 = vst [vmem:[#allocation2 + $0xe0] sm:$0xff] %v729
        %835 = vst [vmem:[#allocation2 + $0xe8] sm:$0xff] %v731
        %836 = vst [vmem:[#allocation2 + $0xf0] sm:$0xff] %v802
        %837 = vst [vmem:[#allocation2 + $0xf8] sm:$0xff] %v804
        %v838 = vld [vmem:[#allocation14] sm:$0xff]
        %v839 = vld [vmem:[#allocation14 + $0x8] sm:$0xff]
        %v840 = vld [vmem:[#allocation14 + $0x10] sm:$0xff]
        %v841 = vld [vmem:[#allocation14 + $0x18] sm:$0xff]
        %v842 = vld [vmem:[#allocation14 + $0x20] sm:$0xff]
        %v843 = vld [vmem:[#allocation14 + $0x28] sm:$0xff]
        %v844 = vld [vmem:[#allocation14 + $0x30] sm:$0xff]
        %v845 = vld [vmem:[#allocation14 + $0x38] sm:$0xff]
        %v846 = vld [vmem:[#allocation14 + $0x40] sm:$0xff]
        %v847 = vld [vmem:[#allocation14 + $0x48] sm:$0xff]
        %v848 = vld [vmem:[#allocation14 + $0x50] sm:$0xff]
        %v849 = vld [vmem:[#allocation14 + $0x58] sm:$0xff]
        %v850 = vld [vmem:[#allocation14 + $0x60] sm:$0xff]
        %v851 = vld [vmem:[#allocation14 + $0x68] sm:$0xff]
        %v852 = vld [vmem:[#allocation14 + $0x70] sm:$0xff]
        %v853 = vld [vmem:[#allocation14 + $0x78] sm:$0xff]
        %v854 = vld [vmem:[#allocation14 + $0x80] sm:$0xff]
        %v855 = vld [vmem:[#allocation14 + $0x88] sm:$0xff]
        %v856 = vld [vmem:[#allocation14 + $0x90] sm:$0xff]
        %v857 = vld [vmem:[#allocation14 + $0x98] sm:$0xff]
        %v858 = vld [vmem:[#allocation14 + $0xa0] sm:$0xff]
        %v859 = vld [vmem:[#allocation14 + $0xa8] sm:$0xff]
        %v860 = vld [vmem:[#allocation14 + $0xb0] sm:$0xff]
        %v861 = vld [vmem:[#allocation14 + $0xb8] sm:$0xff]
        %v862 = vld [vmem:[#allocation14 + $0xc0] sm:$0xff]
        %v863 = vld [vmem:[#allocation14 + $0xc8] sm:$0xff]
        %v864 = vld [vmem:[#allocation14 + $0xd0] sm:$0xff]
        %v865 = vld [vmem:[#allocation14 + $0xd8] sm:$0xff]
        %v866 = vld [vmem:[#allocation14 + $0xe0] sm:$0xff]
        %v867 = vld [vmem:[#allocation14 + $0xe8] sm:$0xff]
        %v868 = vld [vmem:[#allocation14 + $0xf0] sm:$0xff]
        %v869 = vld [vmem:[#allocation14 + $0xf8] sm:$0xff]
        %v870 = vld [vmem:[#allocation4] sm:$0xff]
        %v871 = vld [vmem:[#allocation4 + $0x8] sm:$0xff]
        %v872 = vld [vmem:[#allocation5] sm:$0xff]
        %v873 = vld [vmem:[#allocation5 + $0x8] sm:$0xff]
        %v874 = vld [vmem:[#allocation2] sm:$0xff]
        %v875 = vld [vmem:[#allocation2 + $0x8] sm:$0xff]
        %v876 = vld [vmem:[#allocation2 + $0x10] sm:$0xff]
        %v877 = vld [vmem:[#allocation2 + $0x18] sm:$0xff]
        %v878 = vld [vmem:[#allocation2 + $0x20] sm:$0xff]
        %v879 = vld [vmem:[#allocation2 + $0x28] sm:$0xff]
        %v880 = vld [vmem:[#allocation2 + $0x30] sm:$0xff]
        %v881 = vld [vmem:[#allocation2 + $0x38] sm:$0xff]
        %v882 = vpack.c.bf16 %v871, %v870
        %v915 = vunpack.c.l.b16 %v838
        %v916 = vunpack.c.h.b16 %v838
        %v917 = vunpack.c.l.b16 %v839
        %v918 = vunpack.c.h.b16 %v839
        %v919 = vunpack.c.l.b16 %v840
        %v920 = vunpack.c.h.b16 %v840
        %v921 = vunpack.c.l.b16 %v841
        %v922 = vunpack.c.h.b16 %v841
        %v923 = vunpack.c.l.b16 %v842
        %v924 = vunpack.c.h.b16 %v842
        %v925 = vunpack.c.l.b16 %v843
        %v926 = vunpack.c.h.b16 %v843
        %v927 = vunpack.c.l.b16 %v844
        %v928 = vunpack.c.h.b16 %v844
        %v929 = vunpack.c.l.b16 %v845
        %v930 = vunpack.c.h.b16 %v845
        %v931 = vunpack.c.l.b16 %v846
        %v932 = vunpack.c.h.b16 %v846
        %v933 = vunpack.c.l.b16 %v847
        %v934 = vunpack.c.h.b16 %v847
        %v935 = vunpack.c.l.b16 %v848
        %v936 = vunpack.c.h.b16 %v848
        %v937 = vunpack.c.l.b16 %v849
        %v938 = vunpack.c.h.b16 %v849
        %v939 = vunpack.c.l.b16 %v850
        %v940 = vunpack.c.h.b16 %v850
        %v941 = vunpack.c.l.b16 %v851
        %v942 = vunpack.c.h.b16 %v851
        %v943 = vunpack.c.l.b16 %v852
        %v944 = vunpack.c.h.b16 %v852
        %v945 = vunpack.c.l.b16 %v853
        %v946 = vunpack.c.h.b16 %v853
        %v947 = vunpack.c.l.b16 %v854
        %v948 = vunpack.c.h.b16 %v854
        %v949 = vunpack.c.l.b16 %v855
        %v950 = vunpack.c.h.b16 %v855
        %v951 = vunpack.c.l.b16 %v856
        %v952 = vunpack.c.h.b16 %v856
        %v953 = vunpack.c.l.b16 %v857
        %v954 = vunpack.c.h.b16 %v857
        %v955 = vunpack.c.l.b16 %v858
        %v956 = vunpack.c.h.b16 %v858
        %v957 = vunpack.c.l.b16 %v859
        %v958 = vunpack.c.h.b16 %v859
        %v959 = vunpack.c.l.b16 %v860
        %v960 = vunpack.c.h.b16 %v860
        %v961 = vunpack.c.l.b16 %v861
        %v962 = vunpack.c.h.b16 %v861
        %v963 = vunpack.c.l.b16 %v862
        %v964 = vunpack.c.h.b16 %v862
        %v965 = vunpack.c.l.b16 %v863
        %v966 = vunpack.c.h.b16 %v863
        %v967 = vunpack.c.l.b16 %v864
        %v968 = vunpack.c.h.b16 %v864
        %v969 = vunpack.c.l.b16 %v865
        %v970 = vunpack.c.h.b16 %v865
        %v971 = vunpack.c.l.b16 %v866
        %v972 = vunpack.c.h.b16 %v866
        %v973 = vunpack.c.l.b16 %v867
        %v974 = vunpack.c.h.b16 %v867
        %v975 = vunpack.c.l.b16 %v868
        %v976 = vunpack.c.h.b16 %v868
        %v977 = vunpack.c.l.b16 %v869
        %v978 = vunpack.c.h.b16 %v869
        %v979 = vpack.c.b16 %v919, %v915
        %v980 = vpack.c.b16 %v920, %v916
        %v981 = vpack.c.b16 %v921, %v917
        %v982 = vpack.c.b16 %v922, %v918
        %v983 = vpack.c.b16 %v927, %v923
        %v984 = vpack.c.b16 %v928, %v924
        %v985 = vpack.c.b16 %v929, %v925
        %v986 = vpack.c.b16 %v930, %v926
        %v987 = vpack.c.b16 %v935, %v931
        %v988 = vpack.c.b16 %v936, %v932
        %v989 = vpack.c.b16 %v937, %v933
        %v990 = vpack.c.b16 %v938, %v934
        %v991 = vpack.c.b16 %v943, %v939
        %v992 = vpack.c.b16 %v944, %v940
        %v993 = vpack.c.b16 %v945, %v941
        %v994 = vpack.c.b16 %v946, %v942
        %v995 = vpack.c.b16 %v951, %v947
        %v996 = vpack.c.b16 %v952, %v948
        %v997 = vpack.c.b16 %v953, %v949
        %v998 = vpack.c.b16 %v954, %v950
        %v999 = vpack.c.b16 %v959, %v955
        %v1000 = vpack.c.b16 %v960, %v956
        %v1001 = vpack.c.b16 %v961, %v957
        %v1002 = vpack.c.b16 %v962, %v958
        %v1003 = vpack.c.b16 %v967, %v963
        %v1004 = vpack.c.b16 %v968, %v964
        %v1005 = vpack.c.b16 %v969, %v965
        %v1006 = vpack.c.b16 %v970, %v966
        %v1007 = vpack.c.b16 %v975, %v971
        %v1008 = vpack.c.b16 %v976, %v972
        %v1009 = vpack.c.b16 %v977, %v973
        %v1010 = vpack.c.b16 %v978, %v974
        %1043 = vmatprep.subr.bf16.mxu0 %v980
        %1044 = vmatpush1.bf16.msra.mxu0 %v979
        %1045 = vmatprep.subr.bf16.mxu0 %v984
        %1046 = vmatpush1.bf16.msra.mxu0 %v983
        %1047 = vmatprep.subr.bf16.mxu0 %v988
        %1048 = vmatpush1.bf16.msra.mxu0 %v987
        %1049 = vmatprep.subr.bf16.mxu0 %v992
        %1050 = vmatpush1.bf16.msra.mxu0 %v991
        %1051 = vmatprep.subr.bf16.mxu0 %v996
        %1052 = vmatpush1.bf16.msra.mxu0 %v995
        %1053 = vmatprep.subr.bf16.mxu0 %v1000
        %1054 = vmatpush1.bf16.msra.mxu0 %v999
        %1055 = vmatprep.subr.bf16.mxu0 %v1004
        %1056 = vmatpush1.bf16.msra.mxu0 %v1003
        %1057 = vmatprep.subr.bf16.mxu0 %v1008
        %1058 = vmatpush1.bf16.msra.mxu0 %v1007
        %1059 = vmatprep.subr.bf16.mxu0 0
        %1060 = vmatpush1.bf16.msra.mxu0 0
        %1061 = vmatprep.subr.bf16.mxu0 0
        %1062 = vmatpush1.bf16.msra.mxu0 0
        %1063 = vmatprep.subr.bf16.mxu0 0
        %1064 = vmatpush1.bf16.msra.mxu0 0
        %1065 = vmatprep.subr.bf16.mxu0 0
        %1066 = vmatpush1.bf16.msra.mxu0 0
        %1067 = vmatprep.subr.bf16.mxu0 0
        %1068 = vmatpush1.bf16.msra.mxu0 0
        %1069 = vmatprep.subr.bf16.mxu0 0
        %1070 = vmatpush1.bf16.msra.mxu0 0
        %1071 = vmatprep.subr.bf16.mxu0 0
        %1072 = vmatpush1.bf16.msra.mxu0 0
        %1073 = vmatprep.subr.bf16.mxu0 0
        %1074 = vmatpush1.bf16.msra.mxu0 0
        %1075 = vmatprep.mubr.bf16.mxu0 0
        %1076 = vmatmul.mubr.bf16.gmra.mrb[0].mxu0 %v882
        %v1077 = vpop.f32.mrb[0].mxu0
        %v1078 = vadd.f32 0.0, %v1077
        %v1079 = vpop.f32.mrb[0].mxu0
        %v1080 = vadd.f32 0.0, %v1079
        %v1081 = vpop.f32.mrb[0].mxu0
        %v1082 = vadd.f32 0.0, %v1081
        %v1083 = vpop.f32.mrb[0].mxu0
        %v1084 = vadd.f32 0.0, %v1083
        %1085 = vdwg.mxu0
        %1086 = vmatprep.subr.bf16.mxu0 %v982
        %1087 = vmatpush1.bf16.msra.mxu0 %v981
        %1088 = vmatprep.subr.bf16.mxu0 %v986
        %1089 = vmatpush1.bf16.msra.mxu0 %v985
        %1090 = vmatprep.subr.bf16.mxu0 %v990
        %1091 = vmatpush1.bf16.msra.mxu0 %v989
        %1092 = vmatprep.subr.bf16.mxu0 %v994
        %1093 = vmatpush1.bf16.msra.mxu0 %v993
        %1094 = vmatprep.subr.bf16.mxu0 %v998
        %1095 = vmatpush1.bf16.msra.mxu0 %v997
        %1096 = vmatprep.subr.bf16.mxu0 %v1002
        %1097 = vmatpush1.bf16.msra.mxu0 %v1001
        %1098 = vmatprep.subr.bf16.mxu0 %v1006
        %1099 = vmatpush1.bf16.msra.mxu0 %v1005
        %1100 = vmatprep.subr.bf16.mxu0 %v1010
        %1101 = vmatpush1.bf16.msra.mxu0 %v1009
        %1102 = vmatprep.subr.bf16.mxu0 0
        %1103 = vmatpush1.bf16.msra.mxu0 0
        %1104 = vmatprep.subr.bf16.mxu0 0
        %1105 = vmatpush1.bf16.msra.mxu0 0
        %1106 = vmatprep.subr.bf16.mxu0 0
        %1107 = vmatpush1.bf16.msra.mxu0 0
        %1108 = vmatprep.subr.bf16.mxu0 0
        %1109 = vmatpush1.bf16.msra.mxu0 0
        %1110 = vmatprep.subr.bf16.mxu0 0
        %1111 = vmatpush1.bf16.msra.mxu0 0
        %1112 = vmatprep.subr.bf16.mxu0 0
        %1113 = vmatpush1.bf16.msra.mxu0 0
        %1114 = vmatprep.subr.bf16.mxu0 0
        %1115 = vmatpush1.bf16.msra.mxu0 0
        %1116 = vmatprep.subr.bf16.mxu0 0
        %1117 = vmatpush1.bf16.msra.mxu0 0
        %1118 = vmatprep.mubr.bf16.mxu0 0
        %1119 = vmatmul.mubr.bf16.gmra.mrb[0].mxu0 %v882
        %v1120 = vpop.f32.mrb[0].mxu0
        %v1121 = vadd.f32 0.0, %v1120
        %v1122 = vpop.f32.mrb[0].mxu0
        %v1123 = vadd.f32 0.0, %v1122
        %v1124 = vpop.f32.mrb[0].mxu0
        %v1125 = vadd.f32 0.0, %v1124
        %v1126 = vpop.f32.mrb[0].mxu0
        %v1127 = vadd.f32 0.0, %v1126
        %1128 = vdwg.mxu0
        %v1129 = vadd.f32 %v874, %v1078
        %v1130 = vadd.f32 %v875, %v1080
        %v1131 = vadd.f32 %v876, %v1121
        %v1132 = vadd.f32 %v877, %v1123
        %v1133 = vadd.f32 %v878, %v1082
        %v1134 = vadd.f32 %v879, %v1084
        %v1135 = vadd.f32 %v880, %v1125
        %v1136 = vadd.f32 %v881, %v1127
        %v1137 = vxor.u32 %v1129, 2147483648
        %v1138 = vxor.u32 %v1130, 2147483648
        %v1139 = vxor.u32 %v1131, 2147483648
        %v1140 = vxor.u32 %v1133, 2147483648
        %v1141 = vxor.u32 %v1134, 2147483648
        %v1142 = vxor.u32 %v1135, 2147483648
        %v1143 = vmul.f32 %v1137, 1.442695
        %v1144 = vpow.pop %v1143
        %v1145 = vmul.f32 %v1138, 1.442695
        %v1146 = vpow.pop %v1145
        %v1147 = vmul.f32 %v1139, 1.442695
        %v1148 = vpow.pop %v1147
        %v1149 = vmul.f32 %v1140, 1.442695
        %v1150 = vpow.pop %v1149
        %v1151 = vmul.f32 %v1141, 1.442695
        %v1152 = vpow.pop %v1151
        %v1153 = vmul.f32 %v1142, 1.442695
        %v1154 = vpow.pop %v1153
        %v1155 = vadd.f32 %v1144, 1.0
        %v1156 = vadd.f32 %v1146, 1.0
        %v1157 = vadd.f32 %v1148, 1.0
        %v1158 = vadd.f32 %v1150, 1.0
        %v1159 = vadd.f32 %v1152, 1.0
        %v1160 = vadd.f32 %v1154, 1.0
        %v1161 = vrcp.pop %v1155
        %v1162 = vmul.f32 1.0, %v1161
        %v1163 = vrcp.pop %v1156
        %v1164 = vmul.f32 1.0, %v1163
        %v1165 = vrcp.pop %v1157
        %v1166 = vmul.f32 1.0, %v1165
        %v1167 = vrcp.pop %v1158
        %v1168 = vmul.f32 1.0, %v1167
        %v1169 = vrcp.pop %v1159
        %v1170 = vmul.f32 1.0, %v1169
        %v1171 = vrcp.pop %v1160
        %v1172 = vmul.f32 1.0, %v1171
        %v1173 = vtanh.pop %v1132
        %v1174 = vtanh.pop %v1136
        %v1175 = vmul.f32 %v1164, %v872
        %v1176 = vmul.f32 %v1170, %v873
        %v1177 = vmul.f32 %v1162, %v1173
        %v1178 = vmul.f32 %v1168, %v1174
        %v1179 = vadd.f32 %v1175, %v1177
        %v1180 = vadd.f32 %v1176, %v1178
        %v1181 = vtanh.pop %v1179
        %v1182 = vtanh.pop %v1180
        %v1183 = vmul.f32 %v1166, %v1181
        %v1184 = vmul.f32 %v1172, %v1182
        %v1185 = vpack.c.bf16 %v1184, %v1183
        %1186 = vst [vmem:[#allocation3] sm:$0xff] %v1185
        %v1187 = vld [vmem:[#allocation2 + $0x40] sm:$0xff]
        %v1188 = vld [vmem:[#allocation2 + $0x48] sm:$0xff]
        %v1189 = vld [vmem:[#allocation2 + $0x50] sm:$0xff]
        %v1190 = vld [vmem:[#allocation2 + $0x58] sm:$0xff]
        %v1191 = vld [vmem:[#allocation2 + $0x60] sm:$0xff]
        %v1192 = vld [vmem:[#allocation2 + $0x68] sm:$0xff]
        %v1193 = vld [vmem:[#allocation2 + $0x70] sm:$0xff]
        %v1194 = vld [vmem:[#allocation2 + $0x78] sm:$0xff]
        %1195 = vmatprep.subr.bf16.mxu0 %v980
        %1196 = vmatpush1.bf16.msra.mxu0 %v979
        %1197 = vmatprep.subr.bf16.mxu0 %v984
        %1198 = vmatpush1.bf16.msra.mxu0 %v983
        %1199 = vmatprep.subr.bf16.mxu0 %v988
        %1200 = vmatpush1.bf16.msra.mxu0 %v987
        %1201 = vmatprep.subr.bf16.mxu0 %v992
        %1202 = vmatpush1.bf16.msra.mxu0 %v991
        %1203 = vmatprep.subr.bf16.mxu0 %v996
        %1204 = vmatpush1.bf16.msra.mxu0 %v995
        %1205 = vmatprep.subr.bf16.mxu0 %v1000
        %1206 = vmatpush1.bf16.msra.mxu0 %v999
        %1207 = vmatprep.subr.bf16.mxu0 %v1004
        %1208 = vmatpush1.bf16.msra.mxu0 %v1003
        %1209 = vmatprep.subr.bf16.mxu0 %v1008
        %1210 = vmatpush1.bf16.msra.mxu0 %v1007
        %1211 = vmatprep.subr.bf16.mxu0 0
        %1212 = vmatpush1.bf16.msra.mxu0 0
        %1213 = vmatprep.subr.bf16.mxu0 0
        %1214 = vmatpush1.bf16.msra.mxu0 0
        %1215 = vmatprep.subr.bf16.mxu0 0
        %1216 = vmatpush1.bf16.msra.mxu0 0
        %1217 = vmatprep.subr.bf16.mxu0 0
        %1218 = vmatpush1.bf16.msra.mxu0 0
        %1219 = vmatprep.subr.bf16.mxu0 0
        %1220 = vmatpush1.bf16.msra.mxu0 0
        %1221 = vmatprep.subr.bf16.mxu0 0
        %1222 = vmatpush1.bf16.msra.mxu0 0
        %1223 = vmatprep.subr.bf16.mxu0 0
        %1224 = vmatpush1.bf16.msra.mxu0 0
        %1225 = vmatprep.subr.bf16.mxu0 0
        %1226 = vmatpush1.bf16.msra.mxu0 0
        %1227 = vmatprep.mubr.bf16.mxu0 0
        %1228 = vmatmul.mubr.bf16.gmra.mrb[0].mxu0 %v1185
        %v1229 = vpop.f32.mrb[0].mxu0
        %v1230 = vadd.f32 0.0, %v1229
        %v1231 = vpop.f32.mrb[0].mxu0
        %v1232 = vadd.f32 0.0, %v1231
        %v1233 = vpop.f32.mrb[0].mxu0
        %v1234 = vadd.f32 0.0, %v1233
        %v1235 = vpop.f32.mrb[0].mxu0
        %v1236 = vadd.f32 0.0, %v1235
        %1237 = vdwg.mxu0
        %1238 = vmatprep.subr.bf16.mxu0 %v982
        %1239 = vmatpush1.bf16.msra.mxu0 %v981
        %1240 = vmatprep.subr.bf16.mxu0 %v986
        %1241 = vmatpush1.bf16.msra.mxu0 %v985
        %1242 = vmatprep.subr.bf16.mxu0 %v990
        %1243 = vmatpush1.bf16.msra.mxu0 %v989
        %1244 = vmatprep.subr.bf16.mxu0 %v994
        %1245 = vmatpush1.bf16.msra.mxu0 %v993
        %1246 = vmatprep.subr.bf16.mxu0 %v998
        %1247 = vmatpush1.bf16.msra.mxu0 %v997
        %1248 = vmatprep.subr.bf16.mxu0 %v1002
        %1249 = vmatpush1.bf16.msra.mxu0 %v1001
        %1250 = vmatprep.subr.bf16.mxu0 %v1006
        %1251 = vmatpush1.bf16.msra.mxu0 %v1005
        %1252 = vmatprep.subr.bf16.mxu0 %v1010
        %1253 = vmatpush1.bf16.msra.mxu0 %v1009
        %1254 = vmatprep.subr.bf16.mxu0 0
        %1255 = vmatpush1.bf16.msra.mxu0 0
        %1256 = vmatprep.subr.bf16.mxu0 0
        %1257 = vmatpush1.bf16.msra.mxu0 0
        %1258 = vmatprep.subr.bf16.mxu0 0
        %1259 = vmatpush1.bf16.msra.mxu0 0
        %1260 = vmatprep.subr.bf16.mxu0 0
        %1261 = vmatpush1.bf16.msra.mxu0 0
        %1262 = vmatprep.subr.bf16.mxu0 0
        %1263 = vmatpush1.bf16.msra.mxu0 0
        %1264 = vmatprep.subr.bf16.mxu0 0
        %1265 = vmatpush1.bf16.msra.mxu0 0
        %1266 = vmatprep.subr.bf16.mxu0 0
        %1267 = vmatpush1.bf16.msra.mxu0 0
        %1268 = vmatprep.subr.bf16.mxu0 0
        %1269 = vmatpush1.bf16.msra.mxu0 0
        %1270 = vmatprep.mubr.bf16.mxu0 0
        %1271 = vmatmul.mubr.bf16.gmra.mrb[0].mxu0 %v1185
        %v1272 = vpop.f32.mrb[0].mxu0
        %v1273 = vadd.f32 0.0, %v1272
        %v1274 = vpop.f32.mrb[0].mxu0
        %v1275 = vadd.f32 0.0, %v1274
        %v1276 = vpop.f32.mrb[0].mxu0
        %v1277 = vadd.f32 0.0, %v1276
        %v1278 = vpop.f32.mrb[0].mxu0
        %v1279 = vadd.f32 0.0, %v1278
        %1280 = vdwg.mxu0
        %v1281 = vadd.f32 %v1187, %v1230
        %v1282 = vadd.f32 %v1188, %v1232
        %v1283 = vadd.f32 %v1189, %v1273
        %v1284 = vadd.f32 %v1190, %v1275
        %v1285 = vadd.f32 %v1191, %v1234
        %v1286 = vadd.f32 %v1192, %v1236
        %v1287 = vadd.f32 %v1193, %v1277
        %v1288 = vadd.f32 %v1194, %v1279
        %v1289 = vxor.u32 %v1281, 2147483648
        %v1290 = vxor.u32 %v1282, 2147483648
        %v1291 = vxor.u32 %v1283, 2147483648
        %v1292 = vxor.u32 %v1285, 2147483648
        %v1293 = vxor.u32 %v1286, 2147483648
        %v1294 = vxor.u32 %v1287, 2147483648
        %v1295 = vmul.f32 %v1289, 1.442695
        %v1296 = vpow.pop %v1295
        %v1297 = vmul.f32 %v1290, 1.442695
        %v1298 = vpow.pop %v1297
        %v1299 = vmul.f32 %v1291, 1.442695
        %v1300 = vpow.pop %v1299
        %v1301 = vmul.f32 %v1292, 1.442695
        %v1302 = vpow.pop %v1301
        %v1303 = vmul.f32 %v1293, 1.442695
        %v1304 = vpow.pop %v1303
        %v1305 = vmul.f32 %v1294, 1.442695
        %v1306 = vpow.pop %v1305
        %v1307 = vadd.f32 %v1296, 1.0
        %v1308 = vadd.f32 %v1298, 1.0
        %v1309 = vadd.f32 %v1300, 1.0
        %v1310 = vadd.f32 %v1302, 1.0
        %v1311 = vadd.f32 %v1304, 1.0
        %v1312 = vadd.f32 %v1306, 1.0
        %v1313 = vrcp.pop %v1307
        %v1314 = vmul.f32 1.0, %v1313
        %v1315 = vrcp.pop %v1308
        %v1316 = vmul.f32 1.0, %v1315
        %v1317 = vrcp.pop %v1309
        %v1318 = vmul.f32 1.0, %v1317
        %v1319 = vrcp.pop %v1310
        %v1320 = vmul.f32 1.0, %v1319
        %v1321 = vrcp.pop %v1311
        %v1322 = vmul.f32 1.0, %v1321
        %v1323 = vrcp.pop %v1312
        %v1324 = vmul.f32 1.0, %v1323
        %v1325 = vtanh.pop %v1284
        %v1326 = vtanh.pop %v1288
        %v1327 = vmul.f32 %v1316, %v1179
        %v1328 = vmul.f32 %v1322, %v1180
        %v1329 = vmul.f32 %v1314, %v1325
        %v1330 = vmul.f32 %v1320, %v1326
        %v1331 = vadd.f32 %v1327, %v1329
        %v1332 = vadd.f32 %v1328, %v1330
        %v1333 = vtanh.pop %v1331
        %v1334 = vtanh.pop %v1332
        %v1335 = vmul.f32 %v1318, %v1333
        %v1336 = vmul.f32 %v1324, %v1334
        %v1337 = vpack.c.bf16 %v1336, %v1335
        %1338 = vst [vmem:[#allocation3 + $0x8] sm:$0xff] %v1337
        %v1339 = vld [vmem:[#allocation2 + $0x80] sm:$0xff]
        %v1340 = vld [vmem:[#allocation2 + $0x88] sm:$0xff]
        %v1341 = vld [vmem:[#allocation2 + $0x90] sm:$0xff]
        %v1342 = vld [vmem:[#allocation2 + $0x98] sm:$0xff]
        %v1343 = vld [vmem:[#allocation2 + $0xa0] sm:$0xff]
        %v1344 = vld [vmem:[#allocation2 + $0xa8] sm:$0xff]
        %v1345 = vld [vmem:[#allocation2 + $0xb0] sm:$0xff]
        %v1346 = vld [vmem:[#allocation2 + $0xb8] sm:$0xff]
        %1347 = vmatprep.subr.bf16.mxu0 %v980
        %1348 = vmatpush1.bf16.msra.mxu0 %v979
        %1349 = vmatprep.subr.bf16.mxu0 %v984
        %1350 = vmatpush1.bf16.msra.mxu0 %v983
        %1351 = vmatprep.subr.bf16.mxu0 %v988
        %1352 = vmatpush1.bf16.msra.mxu0 %v987
        %1353 = vmatprep.subr.bf16.mxu0 %v992
        %1354 = vmatpush1.bf16.msra.mxu0 %v991
        %1355 = vmatprep.subr.bf16.mxu0 %v996
        %1356 = vmatpush1.bf16.msra.mxu0 %v995
        %1357 = vmatprep.subr.bf16.mxu0 %v1000
        %1358 = vmatpush1.bf16.msra.mxu0 %v999
        %1359 = vmatprep.subr.bf16.mxu0 %v1004
        %1360 = vmatpush1.bf16.msra.mxu0 %v1003
        %1361 = vmatprep.subr.bf16.mxu0 %v1008
        %1362 = vmatpush1.bf16.msra.mxu0 %v1007
        %1363 = vmatprep.subr.bf16.mxu0 0
        %1364 = vmatpush1.bf16.msra.mxu0 0
        %1365 = vmatprep.subr.bf16.mxu0 0
        %1366 = vmatpush1.bf16.msra.mxu0 0
        %1367 = vmatprep.subr.bf16.mxu0 0
        %1368 = vmatpush1.bf16.msra.mxu0 0
        %1369 = vmatprep.subr.bf16.mxu0 0
        %1370 = vmatpush1.bf16.msra.mxu0 0
        %1371 = vmatprep.subr.bf16.mxu0 0
        %1372 = vmatpush1.bf16.msra.mxu0 0
        %1373 = vmatprep.subr.bf16.mxu0 0
        %1374 = vmatpush1.bf16.msra.mxu0 0
        %1375 = vmatprep.subr.bf16.mxu0 0
        %1376 = vmatpush1.bf16.msra.mxu0 0
        %1377 = vmatprep.subr.bf16.mxu0 0
        %1378 = vmatpush1.bf16.msra.mxu0 0
        %1379 = vmatprep.mubr.bf16.mxu0 0
        %1380 = vmatmul.mubr.bf16.gmra.mrb[0].mxu0 %v1337
        %v1381 = vpop.f32.mrb[0].mxu0
        %v1382 = vadd.f32 0.0, %v1381
        %v1383 = vpop.f32.mrb[0].mxu0
        %v1384 = vadd.f32 0.0, %v1383
        %v1385 = vpop.f32.mrb[0].mxu0
        %v1386 = vadd.f32 0.0, %v1385
        %v1387 = vpop.f32.mrb[0].mxu0
        %v1388 = vadd.f32 0.0, %v1387
        %1389 = vdwg.mxu0
        %1390 = vmatprep.subr.bf16.mxu0 %v982
        %1391 = vmatpush1.bf16.msra.mxu0 %v981
        %1392 = vmatprep.subr.bf16.mxu0 %v986
        %1393 = vmatpush1.bf16.msra.mxu0 %v985
        %1394 = vmatprep.subr.bf16.mxu0 %v990
        %1395 = vmatpush1.bf16.msra.mxu0 %v989
        %1396 = vmatprep.subr.bf16.mxu0 %v994
        %1397 = vmatpush1.bf16.msra.mxu0 %v993
        %1398 = vmatprep.subr.bf16.mxu0 %v998
        %1399 = vmatpush1.bf16.msra.mxu0 %v997
        %1400 = vmatprep.subr.bf16.mxu0 %v1002
        %1401 = vmatpush1.bf16.msra.mxu0 %v1001
        %1402 = vmatprep.subr.bf16.mxu0 %v1006
        %1403 = vmatpush1.bf16.msra.mxu0 %v1005
        %1404 = vmatprep.subr.bf16.mxu0 %v1010
        %1405 = vmatpush1.bf16.msra.mxu0 %v1009
        %1406 = vmatprep.subr.bf16.mxu0 0
        %1407 = vmatpush1.bf16.msra.mxu0 0
        %1408 = vmatprep.subr.bf16.mxu0 0
        %1409 = vmatpush1.bf16.msra.mxu0 0
        %1410 = vmatprep.subr.bf16.mxu0 0
        %1411 = vmatpush1.bf16.msra.mxu0 0
        %1412 = vmatprep.subr.bf16.mxu0 0
        %1413 = vmatpush1.bf16.msra.mxu0 0
        %1414 = vmatprep.subr.bf16.mxu0 0
        %1415 = vmatpush1.bf16.msra.mxu0 0
        %1416 = vmatprep.subr.bf16.mxu0 0
        %1417 = vmatpush1.bf16.msra.mxu0 0
        %1418 = vmatprep.subr.bf16.mxu0 0
        %1419 = vmatpush1.bf16.msra.mxu0 0
        %1420 = vmatprep.subr.bf16.mxu0 0
        %1421 = vmatpush1.bf16.msra.mxu0 0
        %1422 = vmatprep.mubr.bf16.mxu0 0
        %1423 = vmatmul.mubr.bf16.gmra.mrb[0].mxu0 %v1337
        %v1424 = vpop.f32.mrb[0].mxu0
        %v1425 = vadd.f32 0.0, %v1424
        %v1426 = vpop.f32.mrb[0].mxu0
        %v1427 = vadd.f32 0.0, %v1426
        %v1428 = vpop.f32.mrb[0].mxu0
        %v1429 = vadd.f32 0.0, %v1428
        %v1430 = vpop.f32.mrb[0].mxu0
        %v1431 = vadd.f32 0.0, %v1430
        %1432 = vdwg.mxu0
        %v1433 = vadd.f32 %v1339, %v1382
        %v1434 = vadd.f32 %v1340, %v1384
        %v1435 = vadd.f32 %v1341, %v1425
        %v1436 = vadd.f32 %v1342, %v1427
        %v1437 = vadd.f32 %v1343, %v1386
        %v1438 = vadd.f32 %v1344, %v1388
        %v1439 = vadd.f32 %v1345, %v1429
        %v1440 = vadd.f32 %v1346, %v1431
        %v1441 = vxor.u32 %v1433, 2147483648
        %v1442 = vxor.u32 %v1434, 2147483648
        %v1443 = vxor.u32 %v1435, 2147483648
        %v1444 = vxor.u32 %v1437, 2147483648
        %v1445 = vxor.u32 %v1438, 2147483648
        %v1446 = vxor.u32 %v1439, 2147483648
        %v1447 = vmul.f32 %v1441, 1.442695
        %v1448 = vpow.pop %v1447
        %v1449 = vmul.f32 %v1442, 1.442695
        %v1450 = vpow.pop %v1449
        %v1451 = vmul.f32 %v1443, 1.442695
        %v1452 = vpow.pop %v1451
        %v1453 = vmul.f32 %v1444, 1.442695
        %v1454 = vpow.pop %v1453
        %v1455 = vmul.f32 %v1445, 1.442695
        %v1456 = vpow.pop %v1455
        %v1457 = vmul.f32 %v1446, 1.442695
        %v1458 = vpow.pop %v1457
        %v1459 = vadd.f32 %v1448, 1.0
        %v1460 = vadd.f32 %v1450, 1.0
        %v1461 = vadd.f32 %v1452, 1.0
        %v1462 = vadd.f32 %v1454, 1.0
        %v1463 = vadd.f32 %v1456, 1.0
        %v1464 = vadd.f32 %v1458, 1.0
        %v1465 = vrcp.pop %v1459
        %v1466 = vmul.f32 1.0, %v1465
        %v1467 = vrcp.pop %v1460
        %v1468 = vmul.f32 1.0, %v1467
        %v1469 = vrcp.pop %v1461
        %v1470 = vmul.f32 1.0, %v1469
        %v1471 = vrcp.pop %v1462
        %v1472 = vmul.f32 1.0, %v1471
        %v1473 = vrcp.pop %v1463
        %v1474 = vmul.f32 1.0, %v1473
        %v1475 = vrcp.pop %v1464
        %v1476 = vmul.f32 1.0, %v1475
        %v1477 = vtanh.pop %v1436
        %v1478 = vtanh.pop %v1440
        %v1479 = vmul.f32 %v1468, %v1331
        %v1480 = vmul.f32 %v1474, %v1332
        %v1481 = vmul.f32 %v1466, %v1477
        %v1482 = vmul.f32 %v1472, %v1478
        %v1483 = vadd.f32 %v1479, %v1481
        %v1484 = vadd.f32 %v1480, %v1482
        %v1485 = vtanh.pop %v1483
        %v1486 = vtanh.pop %v1484
        %v1487 = vmul.f32 %v1470, %v1485
        %v1488 = vmul.f32 %v1476, %v1486
        %v1489 = vpack.c.bf16 %v1488, %v1487
        %1490 = vst [vmem:[#allocation3 + $0x10] sm:$0xff] %v1489
        %v1491 = vld [vmem:[#allocation2 + $0xc0] sm:$0xff]
        %v1492 = vld [vmem:[#allocation2 + $0xc8] sm:$0xff]
        %v1493 = vld [vmem:[#allocation2 + $0xd0] sm:$0xff]
        %v1494 = vld [vmem:[#allocation2 + $0xd8] sm:$0xff]
        %v1495 = vld [vmem:[#allocation2 + $0xe0] sm:$0xff]
        %v1496 = vld [vmem:[#allocation2 + $0xe8] sm:$0xff]
        %v1497 = vld [vmem:[#allocation2 + $0xf0] sm:$0xff]
        %v1498 = vld [vmem:[#allocation2 + $0xf8] sm:$0xff]
        %1499 = vmatprep.subr.bf16.mxu0 %v980
        %1500 = vmatpush1.bf16.msra.mxu0 %v979
        %1501 = vmatprep.subr.bf16.mxu0 %v984
        %1502 = vmatpush1.bf16.msra.mxu0 %v983
        %1503 = vmatprep.subr.bf16.mxu0 %v988
        %1504 = vmatpush1.bf16.msra.mxu0 %v987
        %1505 = vmatprep.subr.bf16.mxu0 %v992
        %1506 = vmatpush1.bf16.msra.mxu0 %v991
        %1507 = vmatprep.subr.bf16.mxu0 %v996
        %1508 = vmatpush1.bf16.msra.mxu0 %v995
        %1509 = vmatprep.subr.bf16.mxu0 %v1000
        %1510 = vmatpush1.bf16.msra.mxu0 %v999
        %1511 = vmatprep.subr.bf16.mxu0 %v1004
        %1512 = vmatpush1.bf16.msra.mxu0 %v1003
        %1513 = vmatprep.subr.bf16.mxu0 %v1008
        %1514 = vmatpush1.bf16.msra.mxu0 %v1007
        %1515 = vmatprep.subr.bf16.mxu0 0
        %1516 = vmatpush1.bf16.msra.mxu0 0
        %1517 = vmatprep.subr.bf16.mxu0 0
        %1518 = vmatpush1.bf16.msra.mxu0 0
        %1519 = vmatprep.subr.bf16.mxu0 0
        %1520 = vmatpush1.bf16.msra.mxu0 0
        %1521 = vmatprep.subr.bf16.mxu0 0
        %1522 = vmatpush1.bf16.msra.mxu0 0
        %1523 = vmatprep.subr.bf16.mxu0 0
        %1524 = vmatpush1.bf16.msra.mxu0 0
        %1525 = vmatprep.subr.bf16.mxu0 0
        %1526 = vmatpush1.bf16.msra.mxu0 0
        %1527 = vmatprep.subr.bf16.mxu0 0
        %1528 = vmatpush1.bf16.msra.mxu0 0
        %1529 = vmatprep.subr.bf16.mxu0 0
        %1530 = vmatpush1.bf16.msra.mxu0 0
        %1531 = vmatprep.mubr.bf16.mxu0 0
        %1532 = vmatmul.mubr.bf16.gmra.mrb[0].mxu0 %v1489
        %v1533 = vpop.f32.mrb[0].mxu0
        %v1534 = vadd.f32 0.0, %v1533
        %v1535 = vpop.f32.mrb[0].mxu0
        %v1536 = vadd.f32 0.0, %v1535
        %v1537 = vpop.f32.mrb[0].mxu0
        %v1538 = vadd.f32 0.0, %v1537
        %v1539 = vpop.f32.mrb[0].mxu0
        %v1540 = vadd.f32 0.0, %v1539
        %1541 = vdwg.mxu0
        %1542 = vmatprep.subr.bf16.mxu0 %v982
        %1543 = vmatpush1.bf16.msra.mxu0 %v981
        %1544 = vmatprep.subr.bf16.mxu0 %v986
        %1545 = vmatpush1.bf16.msra.mxu0 %v985
        %1546 = vmatprep.subr.bf16.mxu0 %v990
        %1547 = vmatpush1.bf16.msra.mxu0 %v989
        %1548 = vmatprep.subr.bf16.mxu0 %v994
        %1549 = vmatpush1.bf16.msra.mxu0 %v993
        %1550 = vmatprep.subr.bf16.mxu0 %v998
        %1551 = vmatpush1.bf16.msra.mxu0 %v997
        %1552 = vmatprep.subr.bf16.mxu0 %v1002
        %1553 = vmatpush1.bf16.msra.mxu0 %v1001
        %1554 = vmatprep.subr.bf16.mxu0 %v1006
        %1555 = vmatpush1.bf16.msra.mxu0 %v1005
        %1556 = vmatprep.subr.bf16.mxu0 %v1010
        %1557 = vmatpush1.bf16.msra.mxu0 %v1009
        %1558 = vmatprep.subr.bf16.mxu0 0
        %1559 = vmatpush1.bf16.msra.mxu0 0
        %1560 = vmatprep.subr.bf16.mxu0 0
        %1561 = vmatpush1.bf16.msra.mxu0 0
        %1562 = vmatprep.subr.bf16.mxu0 0
        %1563 = vmatpush1.bf16.msra.mxu0 0
        %1564 = vmatprep.subr.bf16.mxu0 0
        %1565 = vmatpush1.bf16.msra.mxu0 0
        %1566 = vmatprep.subr.bf16.mxu0 0
        %1567 = vmatpush1.bf16.msra.mxu0 0
        %1568 = vmatprep.subr.bf16.mxu0 0
        %1569 = vmatpush1.bf16.msra.mxu0 0
        %1570 = vmatprep.subr.bf16.mxu0 0
        %1571 = vmatpush1.bf16.msra.mxu0 0
        %1572 = vmatprep.subr.bf16.mxu0 0
        %1573 = vmatpush1.bf16.msra.mxu0 0
        %1574 = vmatprep.mubr.bf16.mxu0 0
        %1575 = vmatmul.mubr.bf16.gmra.mrb[0].mxu0 %v1489
        %v1576 = vpop.f32.mrb[0].mxu0
        %v1577 = vadd.f32 0.0, %v1576
        %v1578 = vpop.f32.mrb[0].mxu0
        %v1579 = vadd.f32 0.0, %v1578
        %v1580 = vpop.f32.mrb[0].mxu0
        %v1581 = vadd.f32 0.0, %v1580
        %v1582 = vpop.f32.mrb[0].mxu0
        %v1583 = vadd.f32 0.0, %v1582
        %1584 = vdwg.mxu0
        %v1585 = vadd.f32 %v1491, %v1534
        %v1586 = vadd.f32 %v1492, %v1536
        %v1587 = vadd.f32 %v1493, %v1577
        %v1588 = vadd.f32 %v1494, %v1579
        %v1589 = vadd.f32 %v1495, %v1538
        %v1590 = vadd.f32 %v1496, %v1540
        %v1591 = vadd.f32 %v1497, %v1581
        %v1592 = vadd.f32 %v1498, %v1583
        %v1593 = vxor.u32 %v1585, 2147483648
        %v1594 = vxor.u32 %v1586, 2147483648
        %v1595 = vxor.u32 %v1587, 2147483648
        %v1596 = vxor.u32 %v1589, 2147483648
        %v1597 = vxor.u32 %v1590, 2147483648
        %v1598 = vxor.u32 %v1591, 2147483648
        %v1599 = vmul.f32 %v1593, 1.442695
        %v1600 = vpow.pop %v1599
        %v1601 = vmul.f32 %v1594, 1.442695
        %v1602 = vpow.pop %v1601
        %v1603 = vmul.f32 %v1595, 1.442695
        %v1604 = vpow.pop %v1603
        %v1605 = vmul.f32 %v1596, 1.442695
        %v1606 = vpow.pop %v1605
        %v1607 = vmul.f32 %v1597, 1.442695
        %v1608 = vpow.pop %v1607
        %v1609 = vmul.f32 %v1598, 1.442695
        %v1610 = vpow.pop %v1609
        %v1611 = vadd.f32 %v1600, 1.0
        %v1612 = vadd.f32 %v1602, 1.0
        %v1613 = vadd.f32 %v1604, 1.0
        %v1614 = vadd.f32 %v1606, 1.0
        %v1615 = vadd.f32 %v1608, 1.0
        %v1616 = vadd.f32 %v1610, 1.0
        %v1617 = vrcp.pop %v1611
        %v1618 = vmul.f32 1.0, %v1617
        %v1619 = vrcp.pop %v1612
        %v1620 = vmul.f32 1.0, %v1619
        %v1621 = vrcp.pop %v1613
        %v1622 = vmul.f32 1.0, %v1621
        %v1623 = vrcp.pop %v1614
        %v1624 = vmul.f32 1.0, %v1623
        %v1625 = vrcp.pop %v1615
        %v1626 = vmul.f32 1.0, %v1625
        %v1627 = vrcp.pop %v1616
        %v1628 = vmul.f32 1.0, %v1627
        %v1629 = vtanh.pop %v1588
        %v1630 = vtanh.pop %v1592
        %v1631 = vmul.f32 %v1620, %v1483
        %v1632 = vmul.f32 %v1626, %v1484
        %v1633 = vmul.f32 %v1618, %v1629
        %v1634 = vmul.f32 %v1624, %v1630
        %v1635 = vadd.f32 %v1631, %v1633
        %v1636 = vadd.f32 %v1632, %v1634
        %v1637 = vtanh.pop %v1635
        %v1638 = vtanh.pop %v1636
        %v1639 = vmul.f32 %v1622, %v1637
        %v1640 = vmul.f32 %v1628, %v1638
        %v1641 = vpack.c.bf16 %v1640, %v1639
        %1642 = vst [vmem:[#allocation3 + $0x18] sm:$0xff] %v1641
        %1643 = vst [vmem:[#allocation4] sm:$0xff] %v1639
        %1644 = vst [vmem:[#allocation4 + $0x8] sm:$0xff] %v1640
        %1645 = vst [vmem:[#allocation5] sm:$0xff] %v1635
        %1646 = vst [vmem:[#allocation5 + $0x8] sm:$0xff] %v1636
        %v1647 = vld [vmem:[#allocation3] sm:$0xff]
        %v1648 = vld [vmem:[#allocation3 + $0x8] sm:$0xff]
        %v1649 = vld [vmem:[#allocation3 + $0x10] sm:$0xff]
        %v1650 = vld [vmem:[#allocation3 + $0x18] sm:$0xff]
        %v1651 = vld [vmem:[#allocation15] sm:$0xf]
        %v1652 = vld [vmem:[#allocation15 + $0x4] sm:$0xf]
        %v1653 = vld [vmem:[#allocation15 + $0x8] sm:$0xf]
        %v1654 = vld [vmem:[#allocation15 + $0xc] sm:$0xf]
        %v1655 = vld [vmem:[#allocation15 + $0x10] sm:$0xf]
        %v1656 = vld [vmem:[#allocation15 + $0x14] sm:$0xf]
        %v1657 = vld [vmem:[#allocation15 + $0x18] sm:$0xf]
        %v1658 = vld [vmem:[#allocation15 + $0x1c] sm:$0xf]
        %v1659 = vld [vmem:[#allocation15 + $0x20] sm:$0xf]
        %v1660 = vld [vmem:[#allocation15 + $0x24] sm:$0xf]
        %v1661 = vld [vmem:[#allocation15 + $0x28] sm:$0xf]
        %v1662 = vld [vmem:[#allocation15 + $0x2c] sm:$0xf]
        %v1663 = vld [vmem:[#allocation15 + $0x30] sm:$0xf]
        %v1664 = vld [vmem:[#allocation15 + $0x34] sm:$0xf]
        %v1665 = vld [vmem:[#allocation15 + $0x38] sm:$0xf]
        %v1666 = vld [vmem:[#allocation15 + $0x3c] sm:$0xf]
        %v1667 = vld [vmem:[%s5] sm:$0x1]
        %v1669 = vlaneseq
        %v1670 = vshrl.u32 %v1669, 7
        %v1671 = vsub.s32 0, %v1670
        %v1672 = vrot.slane %v1667, %v1671
        %v1690 = vunpack.c.l.b16 %v1651
        %v1691 = vunpack.c.l.b16 %v1652
        %v1692 = vunpack.c.l.b16 %v1653
        %v1693 = vunpack.c.l.b16 %v1654
        %v1694 = vunpack.c.l.b16 %v1655
        %v1695 = vunpack.c.l.b16 %v1656
        %v1696 = vunpack.c.l.b16 %v1657
        %v1697 = vunpack.c.l.b16 %v1658
        %v1698 = vunpack.c.l.b16 %v1659
        %v1699 = vunpack.c.l.b16 %v1660
        %v1700 = vunpack.c.l.b16 %v1661
        %v1701 = vunpack.c.l.b16 %v1662
        %v1702 = vunpack.c.l.b16 %v1663
        %v1703 = vunpack.c.l.b16 %v1664
        %v1704 = vunpack.c.l.b16 %v1665
        %v1705 = vunpack.c.l.b16 %v1666
        %v1706 = vpack.c.b16 %v1691, %v1690
        %v1707 = vpack.c.b16 %v1693, %v1692
        %v1708 = vpack.c.b16 %v1695, %v1694
        %v1709 = vpack.c.b16 %v1697, %v1696
        %v1710 = vpack.c.b16 %v1699, %v1698
        %v1711 = vpack.c.b16 %v1701, %v1700
        %v1712 = vpack.c.b16 %v1703, %v1702
        %v1713 = vpack.c.b16 %v1705, %v1704
        %1722 = vmatprep.subr.bf16.mxu0 0
        %1723 = vmatpush1.bf16.msra.mxu0 %v1706
        %1724 = vmatprep.subr.bf16.mxu0 0
        %1725 = vmatpush1.bf16.msra.mxu0 %v1707
        %1726 = vmatprep.subr.bf16.mxu0 0
        %1727 = vmatpush1.bf16.msra.mxu0 %v1708
        %1728 = vmatprep.subr.bf16.mxu0 0
        %1729 = vmatpush1.bf16.msra.mxu0 %v1709
        %1730 = vmatprep.subr.bf16.mxu0 0
        %1731 = vmatpush1.bf16.msra.mxu0 %v1710
        %1732 = vmatprep.subr.bf16.mxu0 0
        %1733 = vmatpush1.bf16.msra.mxu0 %v1711
        %1734 = vmatprep.subr.bf16.mxu0 0
        %1735 = vmatpush1.bf16.msra.mxu0 %v1712
        %1736 = vmatprep.subr.bf16.mxu0 0
        %1737 = vmatpush1.bf16.msra.mxu0 %v1713
        %1738 = vmatprep.subr.bf16.mxu0 0
        %1739 = vmatpush1.bf16.msra.mxu0 0
        %1740 = vmatprep.subr.bf16.mxu0 0
        %1741 = vmatpush1.bf16.msra.mxu0 0
        %1742 = vmatprep.subr.bf16.mxu0 0
        %1743 = vmatpush1.bf16.msra.mxu0 0
        %1744 = vmatprep.subr.bf16.mxu0 0
        %1745 = vmatpush1.bf16.msra.mxu0 0
        %1746 = vmatprep.subr.bf16.mxu0 0
        %1747 = vmatpush1.bf16.msra.mxu0 0
        %1748 = vmatprep.subr.bf16.mxu0 0
        %1749 = vmatpush1.bf16.msra.mxu0 0
        %1750 = vmatprep.subr.bf16.mxu0 0
        %1751 = vmatpush1.bf16.msra.mxu0 0
        %1752 = vmatprep.subr.bf16.mxu0 0
        %1753 = vmatpush1.bf16.msra.mxu0 0
        %1754 = vmatprep.mubr.bf16.mxu0 0
        %1755 = vmatmul.mubr.bf16.gmra.mrb[0].mxu0 %v1647
        %v1756 = vpop.f32.mrb[0].mxu0
        %v1757 = vadd.f32 %v1672, %v1756
        %v1758 = vpop.f32.mrb[0].mxu0
        %v1759 = vpop.f32.mrb[0].mxu0
        %v1760 = vadd.f32 %v1672, %v1759
        %v1761 = vpop.f32.mrb[0].mxu0
        %1762 = vmatprep.mubr.bf16.mxu0 0
        %1763 = vmatmul.mubr.bf16.gmra.mrb[0].mxu0 %v1648
        %v1764 = vpop.f32.mrb[0].mxu0
        %v1765 = vadd.f32 %v1672, %v1764
        %v1766 = vpop.f32.mrb[0].mxu0
        %v1767 = vpop.f32.mrb[0].mxu0
        %v1768 = vadd.f32 %v1672, %v1767
        %v1769 = vpop.f32.mrb[0].mxu0
        %1770 = vmatprep.mubr.bf16.mxu0 0
        %1771 = vmatmul.mubr.bf16.gmra.mrb[0].mxu0 %v1649
        %v1772 = vpop.f32.mrb[0].mxu0
        %v1773 = vadd.f32 %v1672, %v1772
        %v1774 = vpop.f32.mrb[0].mxu0
        %v1775 = vpop.f32.mrb[0].mxu0
        %v1776 = vadd.f32 %v1672, %v1775
        %v1777 = vpop.f32.mrb[0].mxu0
        %1778 = vmatprep.mubr.bf16.mxu0 0
        %1779 = vmatmul.mubr.bf16.gmra.mrb[0].mxu0 %v1650
        %v1780 = vpop.f32.mrb[0].mxu0
        %v1781 = vadd.f32 %v1672, %v1780
        %v1782 = vpop.f32.mrb[0].mxu0
        %v1783 = vpop.f32.mrb[0].mxu0
        %v1784 = vadd.f32 %v1672, %v1783
        %v1785 = vpop.f32.mrb[0].mxu0
        %1786 = vdwg.mxu0
        %v1787 = vmax.f32 %v1757, 0.0
        %v1788 = vmax.f32 %v1760, 0.0
        %v1789 = vmax.f32 %v1765, 0.0
        %v1790 = vmax.f32 %v1768, 0.0
        %v1791 = vmax.f32 %v1773, 0.0
        %v1792 = vmax.f32 %v1776, 0.0
        %v1793 = vmax.f32 %v1781, 0.0
        %v1794 = vmax.f32 %v1784, 0.0
        %v1795 = vpack.c.bf16 %v1788, %v1787
        %v1796 = vpack.c.bf16 %v1790, %v1789
        %v1797 = vpack.c.bf16 %v1792, %v1791
        %v1798 = vpack.c.bf16 %v1794, %v1793
        %v1799 = vld [vmem:[#allocation17] sm:$0xf]
        %v1800 = vld [vmem:[#allocation17 + $0x4] sm:$0xf]
        %v1801 = vld [vmem:[#allocation17 + $0x8] sm:$0xf]
        %v1802 = vld [vmem:[#allocation17 + $0xc] sm:$0xf]
        %v1803 = vld [vmem:[#allocation17 + $0x10] sm:$0xf]
        %v1804 = vld [vmem:[#allocation17 + $0x14] sm:$0xf]
        %v1805 = vld [vmem:[#allocation17 + $0x18] sm:$0xf]
        %v1806 = vld [vmem:[#allocation17 + $0x1c] sm:$0xf]
        %v1807 = vld [vmem:[#allocation17 + $0x20] sm:$0xf]
        %v1808 = vld [vmem:[#allocation17 + $0x24] sm:$0xf]
        %v1809 = vld [vmem:[#allocation17 + $0x28] sm:$0xf]
        %v1810 = vld [vmem:[#allocation17 + $0x2c] sm:$0xf]
        %v1811 = vld [vmem:[#allocation17 + $0x30] sm:$0xf]
        %v1812 = vld [vmem:[#allocation17 + $0x34] sm:$0xf]
        %v1813 = vld [vmem:[#allocation17 + $0x38] sm:$0xf]
        %v1814 = vld [vmem:[#allocation17 + $0x3c] sm:$0xf]
        %v1815 = vld [vmem:[%s7] sm:$0x1]
        %v1817 = vlaneseq
        %v1818 = vshrl.u32 %v1817, 7
        %v1819 = vsub.s32 0, %v1818
        %v1820 = vrot.slane %v1815, %v1819
        %v1838 = vunpack.c.l.b16 %v1799
        %v1839 = vunpack.c.l.b16 %v1800
        %v1840 = vunpack.c.l.b16 %v1801
        %v1841 = vunpack.c.l.b16 %v1802
        %v1842 = vunpack.c.l.b16 %v1803
        %v1843 = vunpack.c.l.b16 %v1804
        %v1844 = vunpack.c.l.b16 %v1805
        %v1845 = vunpack.c.l.b16 %v1806
        %v1846 = vunpack.c.l.b16 %v1807
        %v1847 = vunpack.c.l.b16 %v1808
        %v1848 = vunpack.c.l.b16 %v1809
        %v1849 = vunpack.c.l.b16 %v1810
        %v1850 = vunpack.c.l.b16 %v1811
        %v1851 = vunpack.c.l.b16 %v1812
        %v1852 = vunpack.c.l.b16 %v1813
        %v1853 = vunpack.c.l.b16 %v1814
        %v1854 = vpack.c.b16 %v1839, %v1838
        %v1855 = vpack.c.b16 %v1841, %v1840
        %v1856 = vpack.c.b16 %v1843, %v1842
        %v1857 = vpack.c.b16 %v1845, %v1844
        %v1858 = vpack.c.b16 %v1847, %v1846
        %v1859 = vpack.c.b16 %v1849, %v1848
        %v1860 = vpack.c.b16 %v1851, %v1850
        %v1861 = vpack.c.b16 %v1853, %v1852
        %1870 = vmatprep.subr.bf16.mxu0 0
        %1871 = vmatpush1.bf16.msra.mxu0 %v1854
        %1872 = vmatprep.subr.bf16.mxu0 0
        %1873 = vmatpush1.bf16.msra.mxu0 %v1855
        %1874 = vmatprep.subr.bf16.mxu0 0
        %1875 = vmatpush1.bf16.msra.mxu0 %v1856
        %1876 = vmatprep.subr.bf16.mxu0 0
        %1877 = vmatpush1.bf16.msra.mxu0 %v1857
        %1878 = vmatprep.subr.bf16.mxu0 0
        %1879 = vmatpush1.bf16.msra.mxu0 %v1858
        %1880 = vmatprep.subr.bf16.mxu0 0
        %1881 = vmatpush1.bf16.msra.mxu0 %v1859
        %1882 = vmatprep.subr.bf16.mxu0 0
        %1883 = vmatpush1.bf16.msra.mxu0 %v1860
        %1884 = vmatprep.subr.bf16.mxu0 0
        %1885 = vmatpush1.bf16.msra.mxu0 %v1861
        %1886 = vmatprep.subr.bf16.mxu0 0
        %1887 = vmatpush1.bf16.msra.mxu0 0
        %1888 = vmatprep.subr.bf16.mxu0 0
        %1889 = vmatpush1.bf16.msra.mxu0 0
        %1890 = vmatprep.subr.bf16.mxu0 0
        %1891 = vmatpush1.bf16.msra.mxu0 0
        %1892 = vmatprep.subr.bf16.mxu0 0
        %1893 = vmatpush1.bf16.msra.mxu0 0
        %1894 = vmatprep.subr.bf16.mxu0 0
        %1895 = vmatpush1.bf16.msra.mxu0 0
        %1896 = vmatprep.subr.bf16.mxu0 0
        %1897 = vmatpush1.bf16.msra.mxu0 0
        %1898 = vmatprep.subr.bf16.mxu0 0
        %1899 = vmatpush1.bf16.msra.mxu0 0
        %1900 = vmatprep.subr.bf16.mxu0 0
        %1901 = vmatpush1.bf16.msra.mxu0 0
        %1902 = vmatprep.mubr.bf16.mxu0 0
        %1903 = vmatmul.mubr.bf16.gmra.mrb[0].mxu0 %v1795
        %v1904 = vpop.f32.mrb[0].mxu0
        %v1905 = vadd.f32 %v1820, %v1904
        %v1906 = vpop.f32.mrb[0].mxu0
        %v1907 = vpop.f32.mrb[0].mxu0
        %v1908 = vadd.f32 %v1820, %v1907
        %v1909 = vpop.f32.mrb[0].mxu0
        %1910 = vmatprep.mubr.bf16.mxu0 0
        %1911 = vmatmul.mubr.bf16.gmra.mrb[0].mxu0 %v1796
        %v1912 = vpop.f32.mrb[0].mxu0
        %v1913 = vadd.f32 %v1820, %v1912
        %v1914 = vpop.f32.mrb[0].mxu0
        %v1915 = vpop.f32.mrb[0].mxu0
        %v1916 = vadd.f32 %v1820, %v1915
        %v1917 = vpop.f32.mrb[0].mxu0
        %1918 = vmatprep.mubr.bf16.mxu0 0
        %1919 = vmatmul.mubr.bf16.gmra.mrb[0].mxu0 %v1797
        %v1920 = vpop.f32.mrb[0].mxu0
        %v1921 = vadd.f32 %v1820, %v1920
        %v1922 = vpop.f32.mrb[0].mxu0
        %v1923 = vpop.f32.mrb[0].mxu0
        %v1924 = vadd.f32 %v1820, %v1923
        %v1925 = vpop.f32.mrb[0].mxu0
        %1926 = vmatprep.mubr.bf16.mxu0 0
        %1927 = vmatmul.mubr.bf16.gmra.mrb[0].mxu0 %v1798
        %v1928 = vpop.f32.mrb[0].mxu0
        %v1929 = vadd.f32 %v1820, %v1928
        %v1930 = vpop.f32.mrb[0].mxu0
        %v1931 = vpop.f32.mrb[0].mxu0
        %v1932 = vadd.f32 %v1820, %v1931
        %v1933 = vpop.f32.mrb[0].mxu0
        %1934 = vdwg.mxu0
        %v1935 = vmax.f32 %v1905, 0.0
        %v1936 = vmax.f32 %v1908, 0.0
        %v1937 = vmax.f32 %v1913, 0.0
        %v1938 = vmax.f32 %v1916, 0.0
        %v1939 = vmax.f32 %v1921, 0.0
        %v1940 = vmax.f32 %v1924, 0.0
        %v1941 = vmax.f32 %v1929, 0.0
        %v1942 = vmax.f32 %v1932, 0.0
        %v1943 = vld [vmem:[%s8] sm:$0x1]
        %v1945 = vlaneseq
        %v1946 = vshrl.u32 %v1945, 7
        %v1947 = vsub.s32 0, %v1946
        %v1948 = vrot.slane %v1943, %v1947
        %v1950 = vmul.f32 %v1935, %v1948
        %v1951 = vmul.f32 %v1936, %v1948
        %v1952 = vmul.f32 %v1937, %v1948
        %v1953 = vmul.f32 %v1938, %v1948
        %v1954 = vmul.f32 %v1939, %v1948
        %v1955 = vmul.f32 %v1940, %v1948
        %v1956 = vmul.f32 %v1941, %v1948
        %v1957 = vmul.f32 %v1942, %v1948
        %1958 = vadd.xlane.f32.xlu0 %v1950
        %v1959 = vpop.xlane.xlu0 %1958
        %1960 = vadd.xlane.f32.xlu0 %v1951
        %v1961 = vpop.xlane.xlu0 %1960
        %1962 = vadd.xlane.f32.xlu0 %v1952
        %v1963 = vpop.xlane.xlu0 %1962
        %1964 = vadd.xlane.f32.xlu0 %v1953
        %v1965 = vpop.xlane.xlu0 %1964
        %1966 = vadd.xlane.f32.xlu0 %v1954
        %v1967 = vpop.xlane.xlu0 %1966
        %1968 = vadd.xlane.f32.xlu0 %v1955
        %v1969 = vpop.xlane.xlu0 %1968
        %1970 = vadd.xlane.f32.xlu0 %v1956
        %v1971 = vpop.xlane.xlu0 %1970
        %1972 = vadd.xlane.f32.xlu0 %v1957
        %v1973 = vpop.xlane.xlu0 %1972
        %v1974 = vunpack.c.l.bf16 %v1647
        %v1975 = vunpack.c.h.bf16 %v1647
        %v1976 = vunpack.c.l.bf16 %v1648
        %v1977 = vunpack.c.h.bf16 %v1648
        %v1978 = vunpack.c.l.bf16 %v1649
        %v1979 = vunpack.c.h.bf16 %v1649
        %v1980 = vunpack.c.l.bf16 %v1650
        %v1981 = vunpack.c.h.bf16 %v1650
        %v1982 = vld [vmem:[#allocation6] sm:$0xff]
        %v1983 = vld [vmem:[#allocation6 + $0x8] sm:$0xff]
        %v1984 = vmax.f32 %v1959, %v1967
        %v1985 = vmax.f32 %v1963, %v1971
        %v1986 = vmax.f32 %v1984, %v1985
        %v1987 = vmax.f32 %v1961, %v1969
        %v1988 = vmax.f32 %v1965, %v1973
        %v1989 = vmax.f32 %v1987, %v1988
        %v1990 = vmax.f32 %v1982, %v1986
        %v1991 = vmax.f32 %v1983, %v1989
        %v1992 = vsub.f32 %v1982, %v1990
        %v1993 = vsub.f32 %v1983, %v1991
        %v1994 = vmul.f32 %v1992, 1.442695
        %v1995 = vpow.pop %v1994
        %v1996 = vmul.f32 %v1993, 1.442695
        %v1997 = vpow.pop %v1996
        %v1998 = vsub.f32 %v1959, %v1990
        %v1999 = vsub.f32 %v1961, %v1991
        %v2000 = vsub.f32 %v1963, %v1990
        %v2001 = vsub.f32 %v1965, %v1991
        %v2002 = vsub.f32 %v1967, %v1990
        %v2003 = vsub.f32 %v1969, %v1991
        %v2004 = vsub.f32 %v1971, %v1990
        %v2005 = vsub.f32 %v1973, %v1991
        %v2006 = vmul.f32 %v1998, 1.442695
        %v2007 = vpow.pop %v2006
        %v2008 = vmul.f32 %v1999, 1.442695
        %v2009 = vpow.pop %v2008
        %v2010 = vmul.f32 %v2000, 1.442695
        %v2011 = vpow.pop %v2010
        %v2012 = vmul.f32 %v2001, 1.442695
        %v2013 = vpow.pop %v2012
        %v2014 = vmul.f32 %v2002, 1.442695
        %v2015 = vpow.pop %v2014
        %v2016 = vmul.f32 %v2003, 1.442695
        %v2017 = vpow.pop %v2016
        %v2018 = vmul.f32 %v2004, 1.442695
        %v2019 = vpow.pop %v2018
        %v2020 = vmul.f32 %v2005, 1.442695
        %v2021 = vpow.pop %v2020
        %v2022 = vld [vmem:[#allocation7] sm:$0xff]
        %v2023 = vld [vmem:[#allocation7 + $0x8] sm:$0xff]
        %v2024 = vmul.f32 %v1995, %v2022
        %v2025 = vmul.f32 %v1997, %v2023
        %vm2026 = vcmask 7168
        %v2027 = vsel %vm2026, %v2007, 0.0
        %v2028 = vsel %vm2026, %v2011, 0.0
        %v2029 = vadd.f32 %v2027, %v2028
        %v2030 = vsel %vm2026, %v2015, 0.0
        %v2031 = vadd.f32 %v2029, %v2030
        %v2032 = vsel %vm2026, %v2019, 0.0
        %v2033 = vadd.f32 %v2031, %v2032
        %v2034 = vsel %vm2026, %v2009, 0.0
        %v2035 = vsel %vm2026, %v2013, 0.0
        %v2036 = vadd.f32 %v2034, %v2035
        %v2037 = vsel %vm2026, %v2017, 0.0
        %v2038 = vadd.f32 %v2036, %v2037
        %v2039 = vsel %vm2026, %v2021, 0.0
        %v2040 = vadd.f32 %v2038, %v2039
        %v2041 = vadd.f32 %v2024, %v2033
        %v2042 = vadd.f32 %v2025, %v2040
        %2043 = vst.msk [vmem:[#allocation7] sm:$0xff] %vm2026, %v2041
        %2044 = vst.msk [vmem:[#allocation7 + $0x8] sm:$0xff] %vm2026, %v2042
        %v2045 = vld [vmem:[#allocation8] sm:$0xff]
        %v2046 = vld [vmem:[#allocation8 + $0x8] sm:$0xff]
        %2048 = vset.pattern.permute.xlu0 0
        %2049 = vperm.xlu0 %2048, %v1995
        %v2050 = vpop.permute.xlu0 %2049
        %2053 = vset.pattern.permute.xlu0 0
        %2054 = vperm.xlu0 %2053, %v1997
        %v2055 = vpop.permute.xlu0 %2054
        %v2057 = vmul.f32 %v2050, %v2045
        %v2058 = vmul.f32 %v2055, %v2046
        %2060 = vset.pattern.permute.xlu0 0
        %2061 = vperm.xlu0 %2060, %v2007
        %v2062 = vpop.permute.xlu0 %2061
        %2065 = vset.pattern.permute.xlu0 0
        %2066 = vperm.xlu0 %2065, %v2009
        %v2067 = vpop.permute.xlu0 %2066
        %2070 = vset.pattern.permute.xlu0 0
        %2071 = vperm.xlu0 %2070, %v2011
        %v2072 = vpop.permute.xlu0 %2071
        %2075 = vset.pattern.permute.xlu0 0
        %2076 = vperm.xlu0 %2075, %v2013
        %v2077 = vpop.permute.xlu0 %2076
        %2080 = vset.pattern.permute.xlu0 0
        %2081 = vperm.xlu0 %2080, %v2015
        %v2082 = vpop.permute.xlu0 %2081
        %2085 = vset.pattern.permute.xlu0 0
        %2086 = vperm.xlu0 %2085, %v2017
        %v2087 = vpop.permute.xlu0 %2086
        %2090 = vset.pattern.permute.xlu0 0
        %2091 = vperm.xlu0 %2090, %v2019
        %v2092 = vpop.permute.xlu0 %2091
        %2095 = vset.pattern.permute.xlu0 0
        %2096 = vperm.xlu0 %2095, %v2021
        %v2097 = vpop.permute.xlu0 %2096
        %v2099 = vmul.f32 %v2062, %v1974
        %v2100 = vmul.f32 %v2067, %v1975
        %v2101 = vmul.f32 %v2072, %v1976
        %v2102 = vmul.f32 %v2077, %v1977
        %v2103 = vmul.f32 %v2082, %v1978
        %v2104 = vmul.f32 %v2087, %v1979
        %v2105 = vmul.f32 %v2092, %v1980
        %v2106 = vmul.f32 %v2097, %v1981
        %v2107 = vadd.f32 %v2099, %v2101
        %v2108 = vadd.f32 %v2107, %v2103
        %v2109 = vadd.f32 %v2108, %v2105
        %v2110 = vadd.f32 %v2100, %v2102
        %v2111 = vadd.f32 %v2110, %v2104
        %v2112 = vadd.f32 %v2111, %v2106
        %v2113 = vadd.f32 %v2057, %v2109
        %v2114 = vadd.f32 %v2058, %v2112
        %2115 = vst [vmem:[#allocation8] sm:$0xff] %v2113
        %2116 = vst [vmem:[#allocation8 + $0x8] sm:$0xff] %v2114
        %2117 = vst.msk [vmem:[#allocation6] sm:$0xff] %vm2026, %v1990
        %2118 = vst.msk [vmem:[#allocation6 + $0x8] sm:$0xff] %vm2026, %v1991
        %p2119 = scmp.eq.s32.totalorder %s26, 1
        // Predicated region
        $region81: #{tpu_custom_call.1} parent=55 // pred_check
          %p2120 = pneg %p2119
        $region82: #{tpu_custom_call.1} parent=55 // pred_check_branch
          %2122 = sbr.rel (%p2120) target = $region84
        $region83: #{tpu_custom_call.1} parent=55 // pred_region
          %v2123 = vld [vmem:[#allocation8] sm:$0xff]
          %v2124 = vld [vmem:[#allocation8 + $0x8] sm:$0xff]
          %v2125 = vld [vmem:[#allocation7] sm:$0xff]
          %v2126 = vld [vmem:[#allocation7 + $0x8] sm:$0xff]
          %v2127 = vrcp.pop %v2125
          %v2128 = vrcp.pop %v2126
          %2130 = vset.pattern.permute.xlu0 0
          %2131 = vperm.xlu0 %2130, %v2127
          %v2132 = vpop.permute.xlu0 %2131
          %2135 = vset.pattern.permute.xlu0 0
          %2136 = vperm.xlu0 %2135, %v2128
          %v2137 = vpop.permute.xlu0 %2136
          %v2139 = vmul.f32 %v2123, %v2132
          %v2140 = vmul.f32 %v2124, %v2137
          %2141 = vst [vmem:[#allocation18] sm:$0xff] %v2139
          %2142 = vst [vmem:[#allocation18 + $0x8] sm:$0xff] %v2140
        $region84: #{tpu_custom_call.1} parent=55 // pred_fallthru
          _
        // Predicated region
        $region85: #{tpu_custom_call.1} parent=55 // pred_check
          %p2143 = pneg %p233
        $region86: #{tpu_custom_call.1} parent=55 // pred_check_branch
          %2145 = sbr.rel (%p2143) target = $region88
        $region87: #{tpu_custom_call.1} parent=55 // pred_region
          %s2147 = ssub.s32 256, 256
          %2148 = vsyncadd [#allocation11], %s2147
          %s2149 = sshll.u32 [#allocation18], 4
          %s2150 = int_to_ptr.vmem [resolvable:$true] %s2149
          %2155 = dma.vmem_to_hbm [thread:$0]  %s2150, 256, %s9, [#allocation11], 128, 128, 8
        $region88: #{tpu_custom_call.1} parent=55 // pred_fallthru
          _
        // Predicated region
        $region89: #{tpu_custom_call.1} parent=55 // pred_check
          %p2156 = pneg %p233
        $region90: #{tpu_custom_call.1} parent=55 // pred_check_branch
          %2158 = sbr.rel (%p2156) target = $region92
        $region91: #{tpu_custom_call.1} parent=55 // pred_region
          %2159 = dma.done [#allocation11], 256
        $region92: #{tpu_custom_call.1} parent=55 // pred_fallthru
          _
      $region56: #{tpu_custom_call.1} parent=5 // pred_fallthru
        _
      %p2160 = scmp.le.s32.totalorder 2, %s21
      // Predicated region
      $region93: #{tpu_custom_call.1} parent=5 // pred_check
        %p2161 = pneg %p2160
      $region94: #{tpu_custom_call.1} parent=5 // pred_check_branch
        %2163 = sbr.rel (%p2161) target = $region96
      $region95: #{tpu_custom_call.1} parent=5 // pred_region
        %s2164 = ssub.s32 %s21, 2
      $region96: #{tpu_custom_call.1} parent=5 // pred_fallthru
        _
    $region6: #{tpu_custom_call.1} parent=1 // loop_footer
      %s25 = sadd.s32 1, %s21
    $region7: #{tpu_custom_call.1} parent=1 // loop_footer_branch
      %20 = sbr.rel target = $region3
    $region8: #{tpu_custom_call.1} parent=1 // loop_exit
      _
    %2165 = vsyncpa [#allocation10], 1
    %s2166 = scalar_lea.sflag [#allocation10], 1
    %2167 = vsyncpa %s2166, 1
    %2168 = vsyncpa [#allocation13], 1
    %2169 = vsyncpa [#allocation16], 1
    %2170 = vsyncpa [#allocation11], 1
    %s2171 = scalar_lea.sflag [#allocation11], 1
    %2172 = vsyncpa %s2171, 1

</llo_original>
